<compile_context>
chip_gen: v6e
topology: v6e:2x2x1
jax: 0.10.0
libtpu: 0.0.40
codegen_flags: <defaults>
</compile_context>

<pallas_src>
import numpy as np
import jax
import jax.numpy as jnp
from jax.experimental import pallas as pl
from jax.experimental.pallas import tpu as pltpu


def _round_up(x, m):
    return ((x + m - 1) // m) * m


# Model dimensions fixed by mnist_fully_connected_IN
D_IN = 28 * 28          # 784
H1 = 600
H2 = 100

# Lane-aligned (padded) dimensions, chosen once.
D_IN_P = _round_up(D_IN, 128)   # 896
H1_P = _round_up(H1, 128)       # 640
H2_P = _round_up(H2, 128)       # 128


# --------------------------- fused Pallas kernel -----------------------------

def _fused_mlp_kernel(x_ref, b1_ref, mask_ref, w1_ref, w2_ref, w3_ref,
                      logits_ref, probs_ref):
    # fc1 (InputNorm's gamma folded into w1, beta folded into the f32 bias b1)
    h1 = jnp.dot(x_ref[...], w1_ref[...], preferred_element_type=jnp.float32)
    h1 = jnp.maximum(h1 + b1_ref[...], 0.0)

    # fc2 -> ReLU
    h2 = jnp.dot(h1.astype(jnp.bfloat16), w2_ref[...],
                 preferred_element_type=jnp.float32)
    h2 = jnp.maximum(h2, 0.0)

    # fc3 -> logits
    logits = jnp.dot(h2.astype(jnp.bfloat16), w3_ref[...],
                     preferred_element_type=jnp.float32)
    logits_ref[...] = logits

    # softmax over valid classes: padded class columns carry a -1e30 additive
    # mask, so their exp underflows to exactly 0.
    masked = logits + mask_ref[...]
    m = jnp.max(masked, axis=-1, keepdims=True)
    e = jnp.exp(masked - m)
    denom = jnp.sum(e, axis=-1, keepdims=True)
    # exact reciprocal (approx=False) so probability rows sum to 1 within 1e-4
    probs_ref[...] = e * pl.reciprocal(denom)


def make_forward(num_classes, batch, tm_max=256):
    """Build a jitted forward for a fixed batch size."""
    ncp = _round_up(num_classes, 128)
    # Batch tile: MXU-native 256 rows on v6e/v7x (use tm_max=128 on v5e); for
    # tiny batches just use the padded batch so we don't waste MXU rows.
    tm = min(tm_max, _round_up(batch, 8))
    bp = _round_up(batch, tm)
    n_tiles = bp // tm

    call = pl.pallas_call(
        _fused_mlp_kernel,
        out_shape=(jax.ShapeDtypeStruct((bp, ncp), jnp.float32),
                   jax.ShapeDtypeStruct((bp, ncp), jnp.float32)),
        grid=(n_tiles,),
        in_specs=[
            pl.BlockSpec((tm, D_IN_P), lambda i: (i, 0)),    # x tile (bf16)
            pl.BlockSpec((1, H1_P), lambda i: (0, 0)),       # b1 row (f32)
            pl.BlockSpec((1, ncp), lambda i: (0, 0)),        # class mask (f32)
            pl.BlockSpec((D_IN_P, H1_P), lambda i: (0, 0)),  # w1 (bf16), VMEM-resident
            pl.BlockSpec((H1_P, H2_P), lambda i: (0, 0)),    # w2 (bf16), VMEM-resident
            pl.BlockSpec((H2_P, ncp), lambda i: (0, 0)),     # w3 (bf16), VMEM-resident
        ],
        out_specs=(pl.BlockSpec((tm, ncp), lambda i: (i, 0)),
                   pl.BlockSpec((tm, ncp), lambda i: (i, 0))),
        compiler_params=pltpu.CompilerParams(
            dimension_semantics=("parallel",)),   # batch tiles are independent
    )

    def forward(prepped, x):
        b = x.shape[0]
        # matches torch `x.view(-1, 28*28)`; InputNorm is elementwise so the
        # folded-into-fc1 form is exactly equivalent.
        xf = x.reshape(b, D_IN).astype(jnp.bfloat16)
        xp = jnp.pad(xf, ((0, bp - b), (0, D_IN_P - D_IN)))
        logits_p, probs_p = call(xp, prepped['b1'], prepped['class_mask'],
                                 prepped['w1'], prepped['w2'], prepped['w3'])
        return logits_p[:b, :num_classes], probs_p[:b, :num_classes]

    return jax.jit(forward)


# --------------------------- parameters --------------------------------------

def init_params(key, num_classes):
    """PyTorch-layout parameters (fc weights are (out_features, in_features))."""
    kg, kb, k1, k2, k3 = jax.random.split(key, 5)
    p = {}
    # InputNorm(1, 28): gamma (1,), beta (1, 28, 28) -- synthetic (non-default)
    p['gamma'] = 1.0 + 0.1 * jax.random.normal(kg, (1,), jnp.float32)
    p['beta'] = 0.05 * jax.random.normal(kb, (1, 28, 28), jnp.float32)

    def lin(k, fout, fin):
        bound = 1.0 / np.sqrt(fin)
        return jax.random.uniform(k, (fout, fin), jnp.float32, -bound, bound)

    p['fc1_w'] = lin(k1, H1, D_IN)
    p['fc2_w'] = lin(k2, H2, H1)
    p['fc3_w'] = lin(k3, num_classes, H2)
    return p


def prepare_params(p, num_classes):
    """One-time prep: fold InputNorm into fc1, transpose, pad, cast to bf16."""
    ncp = _round_up(num_classes, 128)

    def pad_w(w_in_out, kp, np_):
        w = jnp.pad(w_in_out, ((0, kp - w_in_out.shape[0]),
                               (0, np_ - w_in_out.shape[1])))
        return w.astype(jnp.bfloat16)

    # w1 := gamma * fc1_w.T  (gamma scale applied in f32, before the bf16 cast)
    gamma = p['gamma'][0].astype(jnp.float32)
    w1_in_out = gamma * jnp.transpose(p['fc1_w'], (1, 0))
    # b1 := beta_flat @ fc1_w.T   -- kept in f32, added to the f32 accumulator
    beta_flat = p['beta'].reshape(1, D_IN).astype(jnp.float32)
    b1 = beta_flat @ jnp.transpose(p['fc1_w'], (1, 0)).astype(jnp.float32)
    b1 = jnp.pad(b1, ((0, 0), (0, H1_P - H1)))

    # additive class mask: 0 on valid columns, -1e30 on padded columns
    cols = jnp.arange(ncp)[None, :]
    class_mask = jnp.where(cols < num_classes, 0.0, -1e30).astype(jnp.float32)

    return {
        'w1': pad_w(w1_in_out, D_IN_P, H1_P),
        'w2': pad_w(jnp.transpose(p['fc2_w'], (1, 0)), H1_P, H2_P),
        'w3': pad_w(jnp.transpose(p['fc3_w'], (1, 0)), H2_P, ncp),
        'b1': b1,
        'class_mask': class_mask,
    }


# --------------------------- reference (plain JAX, f32) -----------------------

def ref_forward(p, x):
    xn = p['gamma'] * x + p['beta']
    xf = xn.reshape(x.shape[0], D_IN)
    h1 = jnp.maximum(xf @ p['fc1_w'].T, 0.0)
    h2 = jnp.maximum(h1 @ p['fc2_w'].T, 0.0)
    logits = h2 @ p['fc3_w'].T
    return logits, jax.nn.softmax(logits, axis=1)


# --------------------------- main ---------------------------------------------

if __name__ == "__main__":
    num_classes = 10
    B = 2

    key = jax.random.PRNGKey(0)
    kx, kp = jax.random.split(key)
    x = jax.random.normal(kx, (B, 1, 28, 28), jnp.float32)

    params = init_params(kp, num_classes)
    prepped = prepare_params(params, num_classes)

    forward = make_forward(num_classes, B)
    logits, probs = forward(prepped, x)
    jax.block_until_ready((logits, probs))

    assert logits.shape == (B, num_classes)
    assert probs.shape == (B, num_classes)
    assert np.allclose(np.asarray(jnp.sum(probs, axis=-1)), 1.0, atol=1e-4)

    # semantics check vs plain f32 JAX reference (bf16 input/weight streaming
    # -> generous tolerance)
    ref_logits, ref_probs = ref_forward(params, x)
    assert np.allclose(np.asarray(logits), np.asarray(ref_logits),
                       atol=5e-2, rtol=5e-2)
    assert np.allclose(np.asarray(probs), np.asarray(ref_probs), atol=5e-2)

    print("KERNEL_OK")
</pallas_src>

<mosaic_0001>
module attributes {stable_mosaic.version = 11 : i64} {
  func.func @_fused_mlp_kernel(%arg0: i32, %arg1: memref<8x896xbf16, #tpu.memory_space<vmem>>, %arg2: memref<1x640xf32, #tpu.memory_space<vmem>>, %arg3: memref<1x128xf32, #tpu.memory_space<vmem>>, %arg4: memref<896x640xbf16, #tpu.memory_space<vmem>>, %arg5: memref<640x128xbf16, #tpu.memory_space<vmem>>, %arg6: memref<128x128xbf16, #tpu.memory_space<vmem>>, %arg7: memref<8x128xf32, #tpu.memory_space<vmem>>, %arg8: memref<8x128xf32, #tpu.memory_space<vmem>>) attributes {dimension_semantics = [#tpu.dimension_semantics<parallel>], iteration_bounds = array<i64: 1>, scalar_prefetch = 0 : i64, scratch_operands = 0 : i64, tpu.core_type = #tpu.core_type<tc>, window_params = [{transform_indices = @transform_0, window_bounds = array<i64: 8, 896>}, {pipeline_mode = #tpu.pipeline_mode<synchronous>, transform_indices = @transform_1, window_bounds = array<i64: 1, 640>}, {pipeline_mode = #tpu.pipeline_mode<synchronous>, transform_indices = @transform_2, window_bounds = array<i64: 1, 128>}, {pipeline_mode = #tpu.pipeline_mode<synchronous>, transform_indices = @transform_3, window_bounds = array<i64: 896, 640>}, {pipeline_mode = #tpu.pipeline_mode<synchronous>, transform_indices = @transform_4, window_bounds = array<i64: 640, 128>}, {pipeline_mode = #tpu.pipeline_mode<synchronous>, transform_indices = @transform_5, window_bounds = array<i64: 128, 128>}, {transform_indices = @transform_6, window_bounds = array<i64: 8, 128>}, {transform_indices = @transform_7, window_bounds = array<i64: 8, 128>}]} {
    %c0 = arith.constant 0 : index
    %c0_0 = arith.constant 0 : index
    %0 = vector.load %arg1[%c0, %c0_0] : memref<8x896xbf16, #tpu.memory_space<vmem>>, vector<8x896xbf16>
    %c0_1 = arith.constant 0 : index
    %c0_2 = arith.constant 0 : index
    %1 = vector.load %arg4[%c0_1, %c0_2] : memref<896x640xbf16, #tpu.memory_space<vmem>>, vector<896x640xbf16>
    %cst = arith.constant dense<0.000000e+00> : vector<8x640xf32>
    %2 = tpu.matmul %0, %1, %cst {dimension_numbers = #tpu.dot_dimension_numbers<[1], [0], [0], [1], [0, 0, 1, 1], [], []>} : vector<8x896xbf16>, vector<896x640xbf16>, vector<8x640xf32> -> vector<8x640xf32>
    %c0_3 = arith.constant 0 : index
    %c0_4 = arith.constant 0 : index
    %3 = vector.load %arg2[%c0_3, %c0_4] : memref<1x640xf32, #tpu.memory_space<vmem>>, vector<1x640xf32>
    %4 = vector.broadcast %3 : vector<1x640xf32> to vector<8x640xf32>
    %5 = arith.addf %2, %4 : vector<8x640xf32>
    %cst_5 = arith.constant 0.000000e+00 : f32
    %6 = vector.broadcast %cst_5 : f32 to vector<8x640xf32>
    %7 = arith.maximumf %5, %6 : vector<8x640xf32>
    %8 = arith.truncf %7 : vector<8x640xf32> to vector<8x640xbf16>
    %c0_6 = arith.constant 0 : index
    %c0_7 = arith.constant 0 : index
    %9 = vector.load %arg5[%c0_6, %c0_7] : memref<640x128xbf16, #tpu.memory_space<vmem>>, vector<640x128xbf16>
    %cst_8 = arith.constant dense<0.000000e+00> : vector<8x128xf32>
    %10 = tpu.matmul %8, %9, %cst_8 {dimension_numbers = #tpu.dot_dimension_numbers<[1], [0], [0], [1], [0, 0, 1, 1], [], []>} : vector<8x640xbf16>, vector<640x128xbf16>, vector<8x128xf32> -> vector<8x128xf32>
    %cst_9 = arith.constant 0.000000e+00 : f32
    %11 = vector.broadcast %cst_9 : f32 to vector<8x128xf32>
    %12 = arith.maximumf %10, %11 : vector<8x128xf32>
    %13 = arith.truncf %12 : vector<8x128xf32> to vector<8x128xbf16>
    %c0_10 = arith.constant 0 : index
    %c0_11 = arith.constant 0 : index
    %14 = vector.load %arg6[%c0_10, %c0_11] : memref<128x128xbf16, #tpu.memory_space<vmem>>, vector<128x128xbf16>
    %cst_12 = arith.constant dense<0.000000e+00> : vector<8x128xf32>
    %15 = tpu.matmul %13, %14, %cst_12 {dimension_numbers = #tpu.dot_dimension_numbers<[1], [0], [0], [1], [0, 0, 1, 1], [], []>} : vector<8x128xbf16>, vector<128x128xbf16>, vector<8x128xf32> -> vector<8x128xf32>
    %c0_13 = arith.constant 0 : index
    %c0_14 = arith.constant 0 : index
    %16 = vector.load %arg7[%c0_13, %c0_14] : memref<8x128xf32, #tpu.memory_space<vmem>>, vector<8x128xf32>
    tpu.vector_store %arg7[%c0_13, %c0_14], %15 {strides = array<i32>} : memref<8x128xf32, #tpu.memory_space<vmem>>, vector<8x128xf32>,
    %c0_15 = arith.constant 0 : index
    %c0_16 = arith.constant 0 : index
    %17 = vector.load %arg3[%c0_15, %c0_16] : memref<1x128xf32, #tpu.memory_space<vmem>>, vector<1x128xf32>
    %18 = vector.broadcast %17 : vector<1x128xf32> to vector<8x128xf32>
    %19 = arith.addf %15, %18 : vector<8x128xf32>
    %cst_17 = arith.constant dense<0xFF800000> : vector<8xf32>
    %20 = vector.multi_reduction <maximumf>, %19, %cst_17 [1] : vector<8x128xf32> to vector<8xf32>
    %21 = vector.shape_cast %20 : vector<8xf32> to vector<8x1xf32>
    %22 = vector.broadcast %21 : vector<8x1xf32> to vector<8x128xf32>
    %23 = arith.subf %19, %22 : vector<8x128xf32>
    %24 = math.exp %23 : vector<8x128xf32>
    %cst_18 = arith.constant dense<0.000000e+00> : vector<8xf32>
    %25 = vector.multi_reduction <add>, %24, %cst_18 [1] : vector<8x128xf32> to vector<8xf32>
    %26 = vector.shape_cast %25 : vector<8xf32> to vector<8x1xf32>
    %27 = tpu.reciprocal %26 : vector<8x1xf32> -> vector<8x1xf32>
    %28 = vector.broadcast %27 : vector<8x1xf32> to vector<8x128xf32>
    %29 = arith.mulf %24, %28 : vector<8x128xf32>
    %c0_19 = arith.constant 0 : index
    %c0_20 = arith.constant 0 : index
    %30 = vector.load %arg8[%c0_19, %c0_20] : memref<8x128xf32, #tpu.memory_space<vmem>>, vector<8x128xf32>
    tpu.vector_store %arg8[%c0_19, %c0_20], %29 {strides = array<i32>} : memref<8x128xf32, #tpu.memory_space<vmem>>, vector<8x128xf32>,
    return
  }
  func.func @transform_0(%arg0: i32) -> (i32, i32) {
    %c0_i32 = arith.constant 0 : i32
    %c0_i32_0 = arith.constant 0 : i32
    return %arg0, %c0_i32 : i32, i32
  }
  func.func @transform_1(%arg0: i32) -> (i32, i32) {
    %c0_i32 = arith.constant 0 : i32
    %c0_i32_0 = arith.constant 0 : i32
    %c0_i32_1 = arith.constant 0 : i32
    return %c0_i32, %c0_i32_0 : i32, i32
  }
  func.func @transform_2(%arg0: i32) -> (i32, i32) {
    %c0_i32 = arith.constant 0 : i32
    %c0_i32_0 = arith.constant 0 : i32
    %c0_i32_1 = arith.constant 0 : i32
    return %c0_i32, %c0_i32_0 : i32, i32
  }
  func.func @transform_3(%arg0: i32) -> (i32, i32) {
    %c0_i32 = arith.constant 0 : i32
    %c0_i32_0 = arith.constant 0 : i32
    %c0_i32_1 = arith.constant 0 : i32
    return %c0_i32, %c0_i32_0 : i32, i32
  }
  func.func @transform_4(%arg0: i32) -> (i32, i32) {
    %c0_i32 = arith.constant 0 : i32
    %c0_i32_0 = arith.constant 0 : i32
    %c0_i32_1 = arith.constant 0 : i32
    return %c0_i32, %c0_i32_0 : i32, i32
  }
  func.func @transform_5(%arg0: i32) -> (i32, i32) {
    %c0_i32 = arith.constant 0 : i32
    %c0_i32_0 = arith.constant 0 : i32
    %c0_i32_1 = arith.constant 0 : i32
    return %c0_i32, %c0_i32_0 : i32, i32
  }
  func.func @transform_6(%arg0: i32) -> (i32, i32) {
    %c0_i32 = arith.constant 0 : i32
    %c0_i32_0 = arith.constant 0 : i32
    return %arg0, %c0_i32 : i32, i32
  }
  func.func @transform_7(%arg0: i32) -> (i32, i32) {
    %c0_i32 = arith.constant 0 : i32
    %c0_i32_0 = arith.constant 0 : i32
    return %arg0, %c0_i32 : i32, i32
  }
}

</mosaic_0001>

<llo_original>
// kernel: forward.1
$region0: #{forward.1}
  #allocation0 [shape = 'u32[]', space=smem, size = 0x4, offset = 0x4, fixed_abs, tag = 'smem constant byte address 0x4 - core index']
  #allocation1 [shape = 'u32[144,128]{1,0:T(1,128)}', space=vmem, size = 0x12000, scoped, tag = 'internal scratch']
  %s0 = inlined_call_operand.vmem [shape: bf16[8,896], index: 0, kind: input, shape index: {}]
  %s1 = inlined_call_operand.hbm [shape: f32[1,640], index: 1, kind: input, shape index: {}]
  %s2 = inlined_call_operand.hbm [shape: f32[1,128], index: 2, kind: input, shape index: {}]
  %s3 = inlined_call_operand.hbm [shape: bf16[896,640], index: 3, kind: input, shape index: {}]
  %s4 = inlined_call_operand.hbm [shape: bf16[640,128], index: 4, kind: input, shape index: {}]
  %s5 = inlined_call_operand.hbm [shape: bf16[128,128], index: 5, kind: input, shape index: {}]
  %s6 = inlined_call_operand.vmem [shape: f32[8,128], index: 6, kind: output, shape index: {0}]
  %s7 = inlined_call_operand.vmem [shape: f32[8,128], index: 7, kind: output, shape index: {1}]
  %8 = xla_tuple %s6, %s7
  %s9 = sld [smem:[#allocation0]]
  $region62: #{forward.1} parent=0
    _
  %s11 = ssub.s32 1, %s9
  %s12 = scalar_select 0, %s11, %s9
  $region1: #{forward.1} parent=0
    #allocation2 [shape = 'u8[2560]{0}', space=vmem, size = 0xc00, scoped, tag = 'input window, operand 1, single buffered']
    #allocation3 [shape = 's32[1]{0}', space=sflag, size = 0x4, scoped, tag = 'scoped memory for forward.1']
    #allocation4 [shape = 'u8[512]{0}', space=vmem, size = 0x400, scoped, tag = 'input window, operand 2, single buffered']
    #allocation5 [shape = 's32[1]{0}', space=sflag, size = 0x4, scoped, tag = 'scoped memory for forward.1']
    #allocation6 [shape = 'u8[1146880]{0}', space=vmem, size = 0x118000, scoped, tag = 'input window, operand 3, single buffered']
    #allocation7 [shape = 'u8[163840]{0}', space=vmem, size = 0x28000, scoped, tag = 'input window, operand 4, single buffered']
    #allocation8 [shape = 's32[1]{0}', space=sflag, size = 0x4, scoped, tag = 'scoped memory for forward.1']
    #allocation9 [shape = 'u8[32768]{0}', space=vmem, size = 0x8000, scoped, tag = 'input window, operand 5, single buffered']
    %13 = vsyncpa [#allocation3], 0
    %14 = vsyncpa [#allocation5], 0
    %15 = vsyncpa [#allocation8], 0
    // Predicated region
    $region2: #{forward.1} parent=1 // pred_check
      _
    $region3: #{forward.1} parent=1 // pred_check_branch
      %17 = sbr.rel (0) target = $region5
    $region4: #{forward.1} parent=1 // pred_region
      _
    $region5: #{forward.1} parent=1 // pred_fallthru
      _
    // Predicated region
    $region6: #{forward.1} parent=1 // pred_check
      _
    $region7: #{forward.1} parent=1 // pred_check_branch
      %19 = sbr.rel (0) target = $region9
    $region8: #{forward.1} parent=1 // pred_region
      %s21 = ssub.s32 80, 80
      %22 = vsyncadd [#allocation3], %s21
      %s24 = sshll.u32 [#allocation2], 4
      %s25 = int_to_ptr.vmem [resolvable:$true] %s24
      %27 = dma.hbm_to_vmem [thread:$0]  %s1, 80, %s25, [#allocation3]
    $region9: #{forward.1} parent=1 // pred_fallthru
      _
    // Predicated region
    $region10: #{forward.1} parent=1 // pred_check
      _
    $region11: #{forward.1} parent=1 // pred_check_branch
      %29 = sbr.rel (0) target = $region13
    $region12: #{forward.1} parent=1 // pred_region
      %s31 = ssub.s32 16, 16
      %32 = vsyncadd [#allocation5], %s31
      %s34 = sshll.u32 [#allocation4], 4
      %s35 = int_to_ptr.vmem [resolvable:$true] %s34
      %37 = dma.hbm_to_vmem [thread:$0]  %s2, 16, %s35, [#allocation5]
    $region13: #{forward.1} parent=1 // pred_fallthru
      _
    // Predicated region
    $region14: #{forward.1} parent=1 // pred_check
      _
    $region15: #{forward.1} parent=1 // pred_check_branch
      %39 = sbr.rel (0) target = $region17
    $region16: #{forward.1} parent=1 // pred_region
      %s41 = ssub.s32 35840, 35840
      %42 = vsyncadd [#allocation5], %s41
      %s43 = sshll.u32 [#allocation6], 4
      %s44 = int_to_ptr.vmem [resolvable:$true] %s43
      %49 = dma.hbm_to_vmem [thread:$0]  %s3, 35840, %s44, [#allocation5], 320, 320, 20
    $region17: #{forward.1} parent=1 // pred_fallthru
      _
    // Predicated region
    $region18: #{forward.1} parent=1 // pred_check
      _
    $region19: #{forward.1} parent=1 // pred_check_branch
      %51 = sbr.rel (0) target = $region21
    $region20: #{forward.1} parent=1 // pred_region
      %s53 = ssub.s32 5120, 5120
      %54 = vsyncadd [#allocation8], %s53
      %s55 = sshll.u32 [#allocation7], 4
      %s56 = int_to_ptr.vmem [resolvable:$true] %s55
      %61 = dma.hbm_to_vmem [thread:$0]  %s4, 5120, %s56, [#allocation8], 64, 64, 4
    $region21: #{forward.1} parent=1 // pred_fallthru
      _
    // Predicated region
    $region22: #{forward.1} parent=1 // pred_check
      _
    $region23: #{forward.1} parent=1 // pred_check_branch
      %63 = sbr.rel (0) target = $region25
    $region24: #{forward.1} parent=1 // pred_region
      %s65 = ssub.s32 1024, 1024
      %66 = vsyncadd [#allocation8], %s65
      %s67 = sshll.u32 [#allocation9], 4
      %s68 = int_to_ptr.vmem [resolvable:$true] %s67
      %73 = dma.hbm_to_vmem [thread:$0]  %s5, 1024, %s68, [#allocation8], 64, 64, 4
    $region25: #{forward.1} parent=1 // pred_fallthru
      _
    // Predicated region
    $region26: #{forward.1} parent=1 // pred_check
      _
    $region27: #{forward.1} parent=1 // pred_check_branch
      %75 = sbr.rel (0) target = $region29
    $region28: #{forward.1} parent=1 // pred_region
      %76 = dma.done [#allocation3], 80
    $region29: #{forward.1} parent=1 // pred_fallthru
      _
    // Predicated region
    $region30: #{forward.1} parent=1 // pred_check
      _
    $region31: #{forward.1} parent=1 // pred_check_branch
      %78 = sbr.rel (0) target = $region33
    $region32: #{forward.1} parent=1 // pred_region
      %79 = dma.done [#allocation5], 16
    $region33: #{forward.1} parent=1 // pred_fallthru
      _
    // Predicated region
    $region34: #{forward.1} parent=1 // pred_check
      _
    $region35: #{forward.1} parent=1 // pred_check_branch
      %81 = sbr.rel (0) target = $region37
    $region36: #{forward.1} parent=1 // pred_region
      %82 = dma.done [#allocation5], 35840
    $region37: #{forward.1} parent=1 // pred_fallthru
      _
    // Predicated region
    $region38: #{forward.1} parent=1 // pred_check
      _
    $region39: #{forward.1} parent=1 // pred_check_branch
      %84 = sbr.rel (0) target = $region41
    $region40: #{forward.1} parent=1 // pred_region
      %85 = dma.done [#allocation8], 5120
    $region41: #{forward.1} parent=1 // pred_fallthru
      _
    // Predicated region
    $region42: #{forward.1} parent=1 // pred_check
      _
    $region43: #{forward.1} parent=1 // pred_check_branch
      %87 = sbr.rel (0) target = $region45
    $region44: #{forward.1} parent=1 // pred_region
      %88 = dma.done [#allocation8], 1024
    $region45: #{forward.1} parent=1 // pred_fallthru
      _
    %v90 = vld [vmem:[%s0] sm:$0xff]
    %v91 = vld [vmem:[%s0 + $0x8] sm:$0xff]
    %v92 = vld [vmem:[%s0 + $0x10] sm:$0xff]
    %v93 = vld [vmem:[%s0 + $0x18] sm:$0xf]
    %v94 = vld [vmem:[#allocation6] sm:$0xff]
    %v95 = vld [vmem:[#allocation6 + $0x8] sm:$0xff]
    %v96 = vld [vmem:[#allocation6 + $0x10] sm:$0xf]
    %v97 = vld [vmem:[#allocation6 + $0x14] sm:$0xff]
    %v98 = vld [vmem:[#allocation6 + $0x1c] sm:$0xff]
    %v99 = vld [vmem:[#allocation6 + $0x24] sm:$0xf]
    %v100 = vld [vmem:[#allocation6 + $0x28] sm:$0xff]
    %v101 = vld [vmem:[#allocation6 + $0x30] sm:$0xff]
    %v102 = vld [vmem:[#allocation6 + $0x38] sm:$0xf]
    %v103 = vld [vmem:[#allocation6 + $0x3c] sm:$0xff]
    %v104 = vld [vmem:[#allocation6 + $0x44] sm:$0xff]
    %v105 = vld [vmem:[#allocation6 + $0x4c] sm:$0xf]
    %v106 = vld [vmem:[#allocation6 + $0x50] sm:$0xff]
    %v107 = vld [vmem:[#allocation6 + $0x58] sm:$0xff]
    %v108 = vld [vmem:[#allocation6 + $0x60] sm:$0xf]
    %v109 = vld [vmem:[#allocation6 + $0x64] sm:$0xff]
    %v110 = vld [vmem:[#allocation6 + $0x6c] sm:$0xff]
    %v111 = vld [vmem:[#allocation6 + $0x74] sm:$0xf]
    %v112 = vld [vmem:[#allocation6 + $0x78] sm:$0xff]
    %v113 = vld [vmem:[#allocation6 + $0x80] sm:$0xff]
    %v114 = vld [vmem:[#allocation6 + $0x88] sm:$0xf]
    %v115 = vld [vmem:[#allocation6 + $0x8c] sm:$0xff]
    %v116 = vld [vmem:[#allocation6 + $0x94] sm:$0xff]
    %v117 = vld [vmem:[#allocation6 + $0x9c] sm:$0xf]
    %v118 = vld [vmem:[#allocation6 + $0xa0] sm:$0xff]
    %v119 = vld [vmem:[#allocation6 + $0xa8] sm:$0xff]
    %v120 = vld [vmem:[#allocation6 + $0xb0] sm:$0xf]
    %v121 = vld [vmem:[#allocation6 + $0xb4] sm:$0xff]
    %v122 = vld [vmem:[#allocation6 + $0xbc] sm:$0xff]
    %v123 = vld [vmem:[#allocation6 + $0xc4] sm:$0xf]
    %v124 = vld [vmem:[#allocation6 + $0xc8] sm:$0xff]
    %v125 = vld [vmem:[#allocation6 + $0xd0] sm:$0xff]
    %v126 = vld [vmem:[#allocation6 + $0xd8] sm:$0xf]
    %v127 = vld [vmem:[#allocation6 + $0xdc] sm:$0xff]
    %v128 = vld [vmem:[#allocation6 + $0xe4] sm:$0xff]
    %v129 = vld [vmem:[#allocation6 + $0xec] sm:$0xf]
    %v130 = vld [vmem:[#allocation6 + $0xf0] sm:$0xff]
    %v131 = vld [vmem:[#allocation6 + $0xf8] sm:$0xff]
    %v132 = vld [vmem:[#allocation6 + $0x100] sm:$0xf]
    %v133 = vld [vmem:[#allocation6 + $0x104] sm:$0xff]
    %v134 = vld [vmem:[#allocation6 + $0x10c] sm:$0xff]
    %v135 = vld [vmem:[#allocation6 + $0x114] sm:$0xf]
    %v136 = vld [vmem:[#allocation6 + $0x118] sm:$0xff]
    %v137 = vld [vmem:[#allocation6 + $0x120] sm:$0xff]
    %v138 = vld [vmem:[#allocation6 + $0x128] sm:$0xf]
    %v139 = vld [vmem:[#allocation6 + $0x12c] sm:$0xff]
    %v140 = vld [vmem:[#allocation6 + $0x134] sm:$0xff]
    %v141 = vld [vmem:[#allocation6 + $0x13c] sm:$0xf]
    %v142 = vld [vmem:[#allocation6 + $0x140] sm:$0xff]
    %v143 = vld [vmem:[#allocation6 + $0x148] sm:$0xff]
    %v144 = vld [vmem:[#allocation6 + $0x150] sm:$0xf]
    %v145 = vld [vmem:[#allocation6 + $0x154] sm:$0xff]
    %v146 = vld [vmem:[#allocation6 + $0x15c] sm:$0xff]
    %v147 = vld [vmem:[#allocation6 + $0x164] sm:$0xf]
    %v148 = vld [vmem:[#allocation6 + $0x168] sm:$0xff]
    %v149 = vld [vmem:[#allocation6 + $0x170] sm:$0xff]
    %v150 = vld [vmem:[#allocation6 + $0x178] sm:$0xf]
    %v151 = vld [vmem:[#allocation6 + $0x17c] sm:$0xff]
    %v152 = vld [vmem:[#allocation6 + $0x184] sm:$0xff]
    %v153 = vld [vmem:[#allocation6 + $0x18c] sm:$0xf]
    %v154 = vld [vmem:[#allocation6 + $0x190] sm:$0xff]
    %v155 = vld [vmem:[#allocation6 + $0x198] sm:$0xff]
    %v156 = vld [vmem:[#allocation6 + $0x1a0] sm:$0xf]
    %v157 = vld [vmem:[#allocation6 + $0x1a4] sm:$0xff]
    %v158 = vld [vmem:[#allocation6 + $0x1ac] sm:$0xff]
    %v159 = vld [vmem:[#allocation6 + $0x1b4] sm:$0xf]
    %v160 = vld [vmem:[#allocation6 + $0x1b8] sm:$0xff]
    %v161 = vld [vmem:[#allocation6 + $0x1c0] sm:$0xff]
    %v162 = vld [vmem:[#allocation6 + $0x1c8] sm:$0xf]
    %v163 = vld [vmem:[#allocation6 + $0x1cc] sm:$0xff]
    %v164 = vld [vmem:[#allocation6 + $0x1d4] sm:$0xff]
    %v165 = vld [vmem:[#allocation6 + $0x1dc] sm:$0xf]
    %v166 = vld [vmem:[#allocation6 + $0x1e0] sm:$0xff]
    %v167 = vld [vmem:[#allocation6 + $0x1e8] sm:$0xff]
    %v168 = vld [vmem:[#allocation6 + $0x1f0] sm:$0xf]
    %v169 = vld [vmem:[#allocation6 + $0x1f4] sm:$0xff]
    %v170 = vld [vmem:[#allocation6 + $0x1fc] sm:$0xff]
    %v171 = vld [vmem:[#allocation6 + $0x204] sm:$0xf]
    %v172 = vld [vmem:[#allocation6 + $0x208] sm:$0xff]
    %v173 = vld [vmem:[#allocation6 + $0x210] sm:$0xff]
    %v174 = vld [vmem:[#allocation6 + $0x218] sm:$0xf]
    %v175 = vld [vmem:[#allocation6 + $0x21c] sm:$0xff]
    %v176 = vld [vmem:[#allocation6 + $0x224] sm:$0xff]
    %v177 = vld [vmem:[#allocation6 + $0x22c] sm:$0xf]
    %v178 = vld [vmem:[#allocation6 + $0x230] sm:$0xff]
    %v179 = vld [vmem:[#allocation6 + $0x238] sm:$0xff]
    %v180 = vld [vmem:[#allocation6 + $0x240] sm:$0xf]
    %v181 = vld [vmem:[#allocation6 + $0x244] sm:$0xff]
    %v182 = vld [vmem:[#allocation6 + $0x24c] sm:$0xff]
    %v183 = vld [vmem:[#allocation6 + $0x254] sm:$0xf]
    %v184 = vld [vmem:[#allocation6 + $0x258] sm:$0xff]
    %v185 = vld [vmem:[#allocation6 + $0x260] sm:$0xff]
    %v186 = vld [vmem:[#allocation6 + $0x268] sm:$0xf]
    %v187 = vld [vmem:[#allocation6 + $0x26c] sm:$0xff]
    %v188 = vld [vmem:[#allocation6 + $0x274] sm:$0xff]
    %v189 = vld [vmem:[#allocation6 + $0x27c] sm:$0xf]
    %v190 = vld [vmem:[#allocation6 + $0x280] sm:$0xff]
    %v191 = vld [vmem:[#allocation6 + $0x288] sm:$0xff]
    %v192 = vld [vmem:[#allocation6 + $0x290] sm:$0xf]
    %v193 = vld [vmem:[#allocation6 + $0x294] sm:$0xff]
    %v194 = vld [vmem:[#allocation6 + $0x29c] sm:$0xff]
    %v195 = vld [vmem:[#allocation6 + $0x2a4] sm:$0xf]
    %v196 = vld [vmem:[#allocation6 + $0x2a8] sm:$0xff]
    %v197 = vld [vmem:[#allocation6 + $0x2b0] sm:$0xff]
    %v198 = vld [vmem:[#allocation6 + $0x2b8] sm:$0xf]
    %v199 = vld [vmem:[#allocation6 + $0x2bc] sm:$0xff]
    %v200 = vld [vmem:[#allocation6 + $0x2c4] sm:$0xff]
    %v201 = vld [vmem:[#allocation6 + $0x2cc] sm:$0xf]
    %v202 = vld [vmem:[#allocation6 + $0x2d0] sm:$0xff]
    %v203 = vld [vmem:[#allocation6 + $0x2d8] sm:$0xff]
    %v204 = vld [vmem:[#allocation6 + $0x2e0] sm:$0xf]
    %v205 = vld [vmem:[#allocation6 + $0x2e4] sm:$0xff]
    %v206 = vld [vmem:[#allocation6 + $0x2ec] sm:$0xff]
    %v207 = vld [vmem:[#allocation6 + $0x2f4] sm:$0xf]
    %v208 = vld [vmem:[#allocation6 + $0x2f8] sm:$0xff]
    %v209 = vld [vmem:[#allocation6 + $0x300] sm:$0xff]
    %v210 = vld [vmem:[#allocation6 + $0x308] sm:$0xf]
    %v211 = vld [vmem:[#allocation6 + $0x30c] sm:$0xff]
    %v212 = vld [vmem:[#allocation6 + $0x314] sm:$0xff]
    %v213 = vld [vmem:[#allocation6 + $0x31c] sm:$0xf]
    %v214 = vld [vmem:[#allocation6 + $0x320] sm:$0xff]
    %v215 = vld [vmem:[#allocation6 + $0x328] sm:$0xff]
    %v216 = vld [vmem:[#allocation6 + $0x330] sm:$0xf]
    %v217 = vld [vmem:[#allocation6 + $0x334] sm:$0xff]
    %v218 = vld [vmem:[#allocation6 + $0x33c] sm:$0xff]
    %v219 = vld [vmem:[#allocation6 + $0x344] sm:$0xf]
    %v220 = vld [vmem:[#allocation6 + $0x348] sm:$0xff]
    %v221 = vld [vmem:[#allocation6 + $0x350] sm:$0xff]
    %v222 = vld [vmem:[#allocation6 + $0x358] sm:$0xf]
    %v223 = vld [vmem:[#allocation6 + $0x35c] sm:$0xff]
    %v224 = vld [vmem:[#allocation6 + $0x364] sm:$0xff]
    %v225 = vld [vmem:[#allocation6 + $0x36c] sm:$0xf]
    %v226 = vld [vmem:[#allocation6 + $0x370] sm:$0xff]
    %v227 = vld [vmem:[#allocation6 + $0x378] sm:$0xff]
    %v228 = vld [vmem:[#allocation6 + $0x380] sm:$0xf]
    %v229 = vld [vmem:[#allocation6 + $0x384] sm:$0xff]
    %v230 = vld [vmem:[#allocation6 + $0x38c] sm:$0xff]
    %v231 = vld [vmem:[#allocation6 + $0x394] sm:$0xf]
    %v232 = vld [vmem:[#allocation6 + $0x398] sm:$0xff]
    %v233 = vld [vmem:[#allocation6 + $0x3a0] sm:$0xff]
    %v234 = vld [vmem:[#allocation6 + $0x3a8] sm:$0xf]
    %v235 = vld [vmem:[#allocation6 + $0x3ac] sm:$0xff]
    %v236 = vld [vmem:[#allocation6 + $0x3b4] sm:$0xff]
    %v237 = vld [vmem:[#allocation6 + $0x3bc] sm:$0xf]
    %v238 = vld [vmem:[#allocation6 + $0x3c0] sm:$0xff]
    %v239 = vld [vmem:[#allocation6 + $0x3c8] sm:$0xff]
    %v240 = vld [vmem:[#allocation6 + $0x3d0] sm:$0xf]
    %v241 = vld [vmem:[#allocation6 + $0x3d4] sm:$0xff]
    %v242 = vld [vmem:[#allocation6 + $0x3dc] sm:$0xff]
    %v243 = vld [vmem:[#allocation6 + $0x3e4] sm:$0xf]
    %v244 = vld [vmem:[#allocation6 + $0x3e8] sm:$0xff]
    %v245 = vld [vmem:[#allocation6 + $0x3f0] sm:$0xff]
    %v246 = vld [vmem:[#allocation6 + $0x3f8] sm:$0xf]
    %v247 = vld [vmem:[#allocation6 + $0x3fc] sm:$0xff]
    %v248 = vld [vmem:[#allocation6 + $0x404] sm:$0xff]
    %v249 = vld [vmem:[#allocation6 + $0x40c] sm:$0xf]
    %v250 = vld [vmem:[#allocation6 + $0x410] sm:$0xff]
    %v251 = vld [vmem:[#allocation6 + $0x418] sm:$0xff]
    %v252 = vld [vmem:[#allocation6 + $0x420] sm:$0xf]
    %v253 = vld [vmem:[#allocation6 + $0x424] sm:$0xff]
    %v254 = vld [vmem:[#allocation6 + $0x42c] sm:$0xff]
    %v255 = vld [vmem:[#allocation6 + $0x434] sm:$0xf]
    %v256 = vld [vmem:[#allocation6 + $0x438] sm:$0xff]
    %v257 = vld [vmem:[#allocation6 + $0x440] sm:$0xff]
    %v258 = vld [vmem:[#allocation6 + $0x448] sm:$0xf]
    %v259 = vld [vmem:[#allocation6 + $0x44c] sm:$0xff]
    %v260 = vld [vmem:[#allocation6 + $0x454] sm:$0xff]
    %v261 = vld [vmem:[#allocation6 + $0x45c] sm:$0xf]
    %v262 = vld [vmem:[#allocation6 + $0x460] sm:$0xff]
    %v263 = vld [vmem:[#allocation6 + $0x468] sm:$0xff]
    %v264 = vld [vmem:[#allocation6 + $0x470] sm:$0xf]
    %v265 = vld [vmem:[#allocation6 + $0x474] sm:$0xff]
    %v266 = vld [vmem:[#allocation6 + $0x47c] sm:$0xff]
    %v267 = vld [vmem:[#allocation6 + $0x484] sm:$0xf]
    %v268 = vld [vmem:[#allocation6 + $0x488] sm:$0xff]
    %v269 = vld [vmem:[#allocation6 + $0x490] sm:$0xff]
    %v270 = vld [vmem:[#allocation6 + $0x498] sm:$0xf]
    %v271 = vld [vmem:[#allocation6 + $0x49c] sm:$0xff]
    %v272 = vld [vmem:[#allocation6 + $0x4a4] sm:$0xff]
    %v273 = vld [vmem:[#allocation6 + $0x4ac] sm:$0xf]
    %v274 = vld [vmem:[#allocation6 + $0x4b0] sm:$0xff]
    %v275 = vld [vmem:[#allocation6 + $0x4b8] sm:$0xff]
    %v276 = vld [vmem:[#allocation6 + $0x4c0] sm:$0xf]
    %v277 = vld [vmem:[#allocation6 + $0x4c4] sm:$0xff]
    %v278 = vld [vmem:[#allocation6 + $0x4cc] sm:$0xff]
    %v279 = vld [vmem:[#allocation6 + $0x4d4] sm:$0xf]
    %v280 = vld [vmem:[#allocation6 + $0x4d8] sm:$0xff]
    %v281 = vld [vmem:[#allocation6 + $0x4e0] sm:$0xff]
    %v282 = vld [vmem:[#allocation6 + $0x4e8] sm:$0xf]
    %v283 = vld [vmem:[#allocation6 + $0x4ec] sm:$0xff]
    %v284 = vld [vmem:[#allocation6 + $0x4f4] sm:$0xff]
    %v285 = vld [vmem:[#allocation6 + $0x4fc] sm:$0xf]
    %v286 = vld [vmem:[#allocation6 + $0x500] sm:$0xff]
    %v287 = vld [vmem:[#allocation6 + $0x508] sm:$0xff]
    %v288 = vld [vmem:[#allocation6 + $0x510] sm:$0xf]
    %v289 = vld [vmem:[#allocation6 + $0x514] sm:$0xff]
    %v290 = vld [vmem:[#allocation6 + $0x51c] sm:$0xff]
    %v291 = vld [vmem:[#allocation6 + $0x524] sm:$0xf]
    %v292 = vld [vmem:[#allocation6 + $0x528] sm:$0xff]
    %v293 = vld [vmem:[#allocation6 + $0x530] sm:$0xff]
    %v294 = vld [vmem:[#allocation6 + $0x538] sm:$0xf]
    %v295 = vld [vmem:[#allocation6 + $0x53c] sm:$0xff]
    %v296 = vld [vmem:[#allocation6 + $0x544] sm:$0xff]
    %v297 = vld [vmem:[#allocation6 + $0x54c] sm:$0xf]
    %v298 = vld [vmem:[#allocation6 + $0x550] sm:$0xff]
    %v299 = vld [vmem:[#allocation6 + $0x558] sm:$0xff]
    %v300 = vld [vmem:[#allocation6 + $0x560] sm:$0xf]
    %v301 = vld [vmem:[#allocation6 + $0x564] sm:$0xff]
    %v302 = vld [vmem:[#allocation6 + $0x56c] sm:$0xff]
    %v303 = vld [vmem:[#allocation6 + $0x574] sm:$0xf]
    %v304 = vld [vmem:[#allocation6 + $0x578] sm:$0xff]
    %v305 = vld [vmem:[#allocation6 + $0x580] sm:$0xff]
    %v306 = vld [vmem:[#allocation6 + $0x588] sm:$0xf]
    %v307 = vld [vmem:[#allocation6 + $0x58c] sm:$0xff]
    %v308 = vld [vmem:[#allocation6 + $0x594] sm:$0xff]
    %v309 = vld [vmem:[#allocation6 + $0x59c] sm:$0xf]
    %v310 = vld [vmem:[#allocation6 + $0x5a0] sm:$0xff]
    %v311 = vld [vmem:[#allocation6 + $0x5a8] sm:$0xff]
    %v312 = vld [vmem:[#allocation6 + $0x5b0] sm:$0xf]
    %v313 = vld [vmem:[#allocation6 + $0x5b4] sm:$0xff]
    %v314 = vld [vmem:[#allocation6 + $0x5bc] sm:$0xff]
    %v315 = vld [vmem:[#allocation6 + $0x5c4] sm:$0xf]
    %v316 = vld [vmem:[#allocation6 + $0x5c8] sm:$0xff]
    %v317 = vld [vmem:[#allocation6 + $0x5d0] sm:$0xff]
    %v318 = vld [vmem:[#allocation6 + $0x5d8] sm:$0xf]
    %v319 = vld [vmem:[#allocation6 + $0x5dc] sm:$0xff]
    %v320 = vld [vmem:[#allocation6 + $0x5e4] sm:$0xff]
    %v321 = vld [vmem:[#allocation6 + $0x5ec] sm:$0xf]
    %v322 = vld [vmem:[#allocation6 + $0x5f0] sm:$0xff]
    %v323 = vld [vmem:[#allocation6 + $0x5f8] sm:$0xff]
    %v324 = vld [vmem:[#allocation6 + $0x600] sm:$0xf]
    %v325 = vld [vmem:[#allocation6 + $0x604] sm:$0xff]
    %v326 = vld [vmem:[#allocation6 + $0x60c] sm:$0xff]
    %v327 = vld [vmem:[#allocation6 + $0x614] sm:$0xf]
    %v328 = vld [vmem:[#allocation6 + $0x618] sm:$0xff]
    %v329 = vld [vmem:[#allocation6 + $0x620] sm:$0xff]
    %v330 = vld [vmem:[#allocation6 + $0x628] sm:$0xf]
    %v331 = vld [vmem:[#allocation6 + $0x62c] sm:$0xff]
    %v332 = vld [vmem:[#allocation6 + $0x634] sm:$0xff]
    %v333 = vld [vmem:[#allocation6 + $0x63c] sm:$0xf]
    %v334 = vld [vmem:[#allocation6 + $0x640] sm:$0xff]
    %v335 = vld [vmem:[#allocation6 + $0x648] sm:$0xff]
    %v336 = vld [vmem:[#allocation6 + $0x650] sm:$0xf]
    %v337 = vld [vmem:[#allocation6 + $0x654] sm:$0xff]
    %v338 = vld [vmem:[#allocation6 + $0x65c] sm:$0xff]
    %v339 = vld [vmem:[#allocation6 + $0x664] sm:$0xf]
    %v340 = vld [vmem:[#allocation6 + $0x668] sm:$0xff]
    %v341 = vld [vmem:[#allocation6 + $0x670] sm:$0xff]
    %v342 = vld [vmem:[#allocation6 + $0x678] sm:$0xf]
    %v343 = vld [vmem:[#allocation6 + $0x67c] sm:$0xff]
    %v344 = vld [vmem:[#allocation6 + $0x684] sm:$0xff]
    %v345 = vld [vmem:[#allocation6 + $0x68c] sm:$0xf]
    %v346 = vld [vmem:[#allocation6 + $0x690] sm:$0xff]
    %v347 = vld [vmem:[#allocation6 + $0x698] sm:$0xff]
    %v348 = vld [vmem:[#allocation6 + $0x6a0] sm:$0xf]
    %v349 = vld [vmem:[#allocation6 + $0x6a4] sm:$0xff]
    %v350 = vld [vmem:[#allocation6 + $0x6ac] sm:$0xff]
    %v351 = vld [vmem:[#allocation6 + $0x6b4] sm:$0xf]
    %v352 = vld [vmem:[#allocation6 + $0x6b8] sm:$0xff]
    %v353 = vld [vmem:[#allocation6 + $0x6c0] sm:$0xff]
    %v354 = vld [vmem:[#allocation6 + $0x6c8] sm:$0xf]
    %v355 = vld [vmem:[#allocation6 + $0x6cc] sm:$0xff]
    %v356 = vld [vmem:[#allocation6 + $0x6d4] sm:$0xff]
    %v357 = vld [vmem:[#allocation6 + $0x6dc] sm:$0xf]
    %v358 = vld [vmem:[#allocation6 + $0x6e0] sm:$0xff]
    %v359 = vld [vmem:[#allocation6 + $0x6e8] sm:$0xff]
    %v360 = vld [vmem:[#allocation6 + $0x6f0] sm:$0xf]
    %v361 = vld [vmem:[#allocation6 + $0x6f4] sm:$0xff]
    %v362 = vld [vmem:[#allocation6 + $0x6fc] sm:$0xff]
    %v363 = vld [vmem:[#allocation6 + $0x704] sm:$0xf]
    %v364 = vld [vmem:[#allocation6 + $0x708] sm:$0xff]
    %v365 = vld [vmem:[#allocation6 + $0x710] sm:$0xff]
    %v366 = vld [vmem:[#allocation6 + $0x718] sm:$0xf]
    %v367 = vld [vmem:[#allocation6 + $0x71c] sm:$0xff]
    %v368 = vld [vmem:[#allocation6 + $0x724] sm:$0xff]
    %v369 = vld [vmem:[#allocation6 + $0x72c] sm:$0xf]
    %v370 = vld [vmem:[#allocation6 + $0x730] sm:$0xff]
    %v371 = vld [vmem:[#allocation6 + $0x738] sm:$0xff]
    %v372 = vld [vmem:[#allocation6 + $0x740] sm:$0xf]
    %v373 = vld [vmem:[#allocation6 + $0x744] sm:$0xff]
    %v374 = vld [vmem:[#allocation6 + $0x74c] sm:$0xff]
    %v375 = vld [vmem:[#allocation6 + $0x754] sm:$0xf]
    %v376 = vld [vmem:[#allocation6 + $0x758] sm:$0xff]
    %v377 = vld [vmem:[#allocation6 + $0x760] sm:$0xff]
    %v378 = vld [vmem:[#allocation6 + $0x768] sm:$0xf]
    %v379 = vld [vmem:[#allocation6 + $0x76c] sm:$0xff]
    %v380 = vld [vmem:[#allocation6 + $0x774] sm:$0xff]
    %v381 = vld [vmem:[#allocation6 + $0x77c] sm:$0xf]
    %v382 = vld [vmem:[#allocation6 + $0x780] sm:$0xff]
    %v383 = vld [vmem:[#allocation6 + $0x788] sm:$0xff]
    %v384 = vld [vmem:[#allocation6 + $0x790] sm:$0xf]
    %v385 = vld [vmem:[#allocation6 + $0x794] sm:$0xff]
    %v386 = vld [vmem:[#allocation6 + $0x79c] sm:$0xff]
    %v387 = vld [vmem:[#allocation6 + $0x7a4] sm:$0xf]
    %v388 = vld [vmem:[#allocation6 + $0x7a8] sm:$0xff]
    %v389 = vld [vmem:[#allocation6 + $0x7b0] sm:$0xff]
    %v390 = vld [vmem:[#allocation6 + $0x7b8] sm:$0xf]
    %v391 = vld [vmem:[#allocation6 + $0x7bc] sm:$0xff]
    %v392 = vld [vmem:[#allocation6 + $0x7c4] sm:$0xff]
    %v393 = vld [vmem:[#allocation6 + $0x7cc] sm:$0xf]
    %v394 = vld [vmem:[#allocation6 + $0x7d0] sm:$0xff]
    %v395 = vld [vmem:[#allocation6 + $0x7d8] sm:$0xff]
    %v396 = vld [vmem:[#allocation6 + $0x7e0] sm:$0xf]
    %v397 = vld [vmem:[#allocation6 + $0x7e4] sm:$0xff]
    %v398 = vld [vmem:[#allocation6 + $0x7ec] sm:$0xff]
    %v399 = vld [vmem:[#allocation6 + $0x7f4] sm:$0xf]
    %v400 = vld [vmem:[#allocation6 + $0x7f8] sm:$0xff]
    %v401 = vld [vmem:[#allocation6 + $0x800] sm:$0xff]
    %v402 = vld [vmem:[#allocation6 + $0x808] sm:$0xf]
    %v403 = vld [vmem:[#allocation6 + $0x80c] sm:$0xff]
    %v404 = vld [vmem:[#allocation6 + $0x814] sm:$0xff]
    %v405 = vld [vmem:[#allocation6 + $0x81c] sm:$0xf]
    %v406 = vld [vmem:[#allocation6 + $0x820] sm:$0xff]
    %v407 = vld [vmem:[#allocation6 + $0x828] sm:$0xff]
    %v408 = vld [vmem:[#allocation6 + $0x830] sm:$0xf]
    %v409 = vld [vmem:[#allocation6 + $0x834] sm:$0xff]
    %v410 = vld [vmem:[#allocation6 + $0x83c] sm:$0xff]
    %v411 = vld [vmem:[#allocation6 + $0x844] sm:$0xf]
    %v412 = vld [vmem:[#allocation6 + $0x848] sm:$0xff]
    %v413 = vld [vmem:[#allocation6 + $0x850] sm:$0xff]
    %v414 = vld [vmem:[#allocation6 + $0x858] sm:$0xf]
    %v415 = vld [vmem:[#allocation6 + $0x85c] sm:$0xff]
    %v416 = vld [vmem:[#allocation6 + $0x864] sm:$0xff]
    %v417 = vld [vmem:[#allocation6 + $0x86c] sm:$0xf]
    %v418 = vld [vmem:[#allocation6 + $0x870] sm:$0xff]
    %v419 = vld [vmem:[#allocation6 + $0x878] sm:$0xff]
    %v420 = vld [vmem:[#allocation6 + $0x880] sm:$0xf]
    %v421 = vld [vmem:[#allocation6 + $0x884] sm:$0xff]
    %v422 = vld [vmem:[#allocation6 + $0x88c] sm:$0xff]
    %v423 = vld [vmem:[#allocation6 + $0x894] sm:$0xf]
    %v424 = vld [vmem:[#allocation6 + $0x898] sm:$0xff]
    %v425 = vld [vmem:[#allocation6 + $0x8a0] sm:$0xff]
    %v426 = vld [vmem:[#allocation6 + $0x8a8] sm:$0xf]
    %v427 = vld [vmem:[#allocation6 + $0x8ac] sm:$0xff]
    %v428 = vld [vmem:[#allocation6 + $0x8b4] sm:$0xff]
    %v429 = vld [vmem:[#allocation6 + $0x8bc] sm:$0xf]
    %v430 = vld [vmem:[#allocation2] sm:$0x1f]
    %v432 = vlaneseq
    %v433 = vshrl.u32 %v432, 7
    %v434 = vsub.s32 0, %v433
    %v435 = vrot.slane %v430, %v434
    %v436 = vlaneseq
    %v437 = vshrl.u32 %v436, 7
    %v438 = vsub.s32 1, %v437
    %v439 = vrot.slane %v430, %v438
    %v440 = vlaneseq
    %v441 = vshrl.u32 %v440, 7
    %v442 = vsub.s32 2, %v441
    %v443 = vrot.slane %v430, %v442
    %v444 = vlaneseq
    %v445 = vshrl.u32 %v444, 7
    %v446 = vsub.s32 3, %v445
    %v447 = vrot.slane %v430, %v446
    %v448 = vlaneseq
    %v449 = vshrl.u32 %v448, 7
    %v450 = vsub.s32 4, %v449
    %v451 = vrot.slane %v430, %v450
    %v461 = vunpack.c.l.b16 %v90
    %v462 = vunpack.c.h.b16 %v90
    %v463 = vunpack.c.l.b16 %v91
    %v464 = vunpack.c.h.b16 %v91
    %v465 = vunpack.c.l.b16 %v92
    %v466 = vunpack.c.h.b16 %v92
    %v467 = vunpack.c.l.b16 %v93
    %v468 = vpack.c.b16 %v461, %v461
    %v469 = vpack.c.b16 %v462, %v462
    %v470 = vpack.c.b16 %v463, %v463
    %v471 = vpack.c.b16 %v464, %v464
    %v472 = vpack.c.b16 %v465, %v465
    %v473 = vpack.c.b16 %v466, %v466
    %v474 = vpack.c.b16 %v467, %v467
    %v818 = vunpack.c.l.b16 %v94
    %v819 = vunpack.c.h.b16 %v94
    %v820 = vunpack.c.l.b16 %v95
    %v821 = vunpack.c.h.b16 %v95
    %v822 = vunpack.c.l.b16 %v96
    %v823 = vunpack.c.l.b16 %v97
    %v824 = vunpack.c.h.b16 %v97
    %v825 = vunpack.c.l.b16 %v98
    %v826 = vunpack.c.h.b16 %v98
    %v827 = vunpack.c.l.b16 %v99
    %v828 = vunpack.c.l.b16 %v100
    %v829 = vunpack.c.h.b16 %v100
    %v830 = vunpack.c.l.b16 %v101
    %v831 = vunpack.c.h.b16 %v101
    %v832 = vunpack.c.l.b16 %v102
    %v833 = vunpack.c.l.b16 %v103
    %v834 = vunpack.c.h.b16 %v103
    %v835 = vunpack.c.l.b16 %v104
    %v836 = vunpack.c.h.b16 %v104
    %v837 = vunpack.c.l.b16 %v105
    %v838 = vunpack.c.l.b16 %v106
    %v839 = vunpack.c.h.b16 %v106
    %v840 = vunpack.c.l.b16 %v107
    %v841 = vunpack.c.h.b16 %v107
    %v842 = vunpack.c.l.b16 %v108
    %v843 = vunpack.c.l.b16 %v109
    %v844 = vunpack.c.h.b16 %v109
    %v845 = vunpack.c.l.b16 %v110
    %v846 = vunpack.c.h.b16 %v110
    %v847 = vunpack.c.l.b16 %v111
    %v848 = vunpack.c.l.b16 %v112
    %v849 = vunpack.c.h.b16 %v112
    %v850 = vunpack.c.l.b16 %v113
    %v851 = vunpack.c.h.b16 %v113
    %v852 = vunpack.c.l.b16 %v114
    %v853 = vunpack.c.l.b16 %v115
    %v854 = vunpack.c.h.b16 %v115
    %v855 = vunpack.c.l.b16 %v116
    %v856 = vunpack.c.h.b16 %v116
    %v857 = vunpack.c.l.b16 %v117
    %v858 = vunpack.c.l.b16 %v118
    %v859 = vunpack.c.h.b16 %v118
    %v860 = vunpack.c.l.b16 %v119
    %v861 = vunpack.c.h.b16 %v119
    %v862 = vunpack.c.l.b16 %v120
    %v863 = vunpack.c.l.b16 %v121
    %v864 = vunpack.c.h.b16 %v121
    %v865 = vunpack.c.l.b16 %v122
    %v866 = vunpack.c.h.b16 %v122
    %v867 = vunpack.c.l.b16 %v123
    %v868 = vunpack.c.l.b16 %v124
    %v869 = vunpack.c.h.b16 %v124
    %v870 = vunpack.c.l.b16 %v125
    %v871 = vunpack.c.h.b16 %v125
    %v872 = vunpack.c.l.b16 %v126
    %v873 = vunpack.c.l.b16 %v127
    %v874 = vunpack.c.h.b16 %v127
    %v875 = vunpack.c.l.b16 %v128
    %v876 = vunpack.c.h.b16 %v128
    %v877 = vunpack.c.l.b16 %v129
    %v878 = vunpack.c.l.b16 %v130
    %v879 = vunpack.c.h.b16 %v130
    %v880 = vunpack.c.l.b16 %v131
    %v881 = vunpack.c.h.b16 %v131
    %v882 = vunpack.c.l.b16 %v132
    %v883 = vunpack.c.l.b16 %v133
    %v884 = vunpack.c.h.b16 %v133
    %v885 = vunpack.c.l.b16 %v134
    %v886 = vunpack.c.h.b16 %v134
    %v887 = vunpack.c.l.b16 %v135
    %v888 = vunpack.c.l.b16 %v136
    %v889 = vunpack.c.h.b16 %v136
    %v890 = vunpack.c.l.b16 %v137
    %v891 = vunpack.c.h.b16 %v137
    %v892 = vunpack.c.l.b16 %v138
    %v893 = vunpack.c.l.b16 %v139
    %v894 = vunpack.c.h.b16 %v139
    %v895 = vunpack.c.l.b16 %v140
    %v896 = vunpack.c.h.b16 %v140
    %v897 = vunpack.c.l.b16 %v141
    %v898 = vunpack.c.l.b16 %v142
    %v899 = vunpack.c.h.b16 %v142
    %v900 = vunpack.c.l.b16 %v143
    %v901 = vunpack.c.h.b16 %v143
    %v902 = vunpack.c.l.b16 %v144
    %v903 = vunpack.c.l.b16 %v145
    %v904 = vunpack.c.h.b16 %v145
    %v905 = vunpack.c.l.b16 %v146
    %v906 = vunpack.c.h.b16 %v146
    %v907 = vunpack.c.l.b16 %v147
    %v908 = vunpack.c.l.b16 %v148
    %v909 = vunpack.c.h.b16 %v148
    %v910 = vunpack.c.l.b16 %v149
    %v911 = vunpack.c.h.b16 %v149
    %v912 = vunpack.c.l.b16 %v150
    %v913 = vunpack.c.l.b16 %v151
    %v914 = vunpack.c.h.b16 %v151
    %v915 = vunpack.c.l.b16 %v152
    %v916 = vunpack.c.h.b16 %v152
    %v917 = vunpack.c.l.b16 %v153
    %v918 = vunpack.c.l.b16 %v154
    %v919 = vunpack.c.h.b16 %v154
    %v920 = vunpack.c.l.b16 %v155
    %v921 = vunpack.c.h.b16 %v155
    %v922 = vunpack.c.l.b16 %v156
    %v923 = vunpack.c.l.b16 %v157
    %v924 = vunpack.c.h.b16 %v157
    %v925 = vunpack.c.l.b16 %v158
    %v926 = vunpack.c.h.b16 %v158
    %v927 = vunpack.c.l.b16 %v159
    %v928 = vunpack.c.l.b16 %v160
    %v929 = vunpack.c.h.b16 %v160
    %v930 = vunpack.c.l.b16 %v161
    %v931 = vunpack.c.h.b16 %v161
    %v932 = vunpack.c.l.b16 %v162
    %v933 = vunpack.c.l.b16 %v163
    %v934 = vunpack.c.h.b16 %v163
    %v935 = vunpack.c.l.b16 %v164
    %v936 = vunpack.c.h.b16 %v164
    %v937 = vunpack.c.l.b16 %v165
    %v938 = vunpack.c.l.b16 %v166
    %v939 = vunpack.c.h.b16 %v166
    %v940 = vunpack.c.l.b16 %v167
    %v941 = vunpack.c.h.b16 %v167
    %v942 = vunpack.c.l.b16 %v168
    %v943 = vunpack.c.l.b16 %v169
    %v944 = vunpack.c.h.b16 %v169
    %v945 = vunpack.c.l.b16 %v170
    %v946 = vunpack.c.h.b16 %v170
    %v947 = vunpack.c.l.b16 %v171
    %v948 = vunpack.c.l.b16 %v172
    %v949 = vunpack.c.h.b16 %v172
    %v950 = vunpack.c.l.b16 %v173
    %v951 = vunpack.c.h.b16 %v173
    %v952 = vunpack.c.l.b16 %v174
    %v953 = vunpack.c.l.b16 %v175
    %v954 = vunpack.c.h.b16 %v175
    %v955 = vunpack.c.l.b16 %v176
    %v956 = vunpack.c.h.b16 %v176
    %v957 = vunpack.c.l.b16 %v177
    %v958 = vunpack.c.l.b16 %v178
    %v959 = vunpack.c.h.b16 %v178
    %v960 = vunpack.c.l.b16 %v179
    %v961 = vunpack.c.h.b16 %v179
    %v962 = vunpack.c.l.b16 %v180
    %v963 = vunpack.c.l.b16 %v181
    %v964 = vunpack.c.h.b16 %v181
    %v965 = vunpack.c.l.b16 %v182
    %v966 = vunpack.c.h.b16 %v182
    %v967 = vunpack.c.l.b16 %v183
    %v968 = vunpack.c.l.b16 %v184
    %v969 = vunpack.c.h.b16 %v184
    %v970 = vunpack.c.l.b16 %v185
    %v971 = vunpack.c.h.b16 %v185
    %v972 = vunpack.c.l.b16 %v186
    %v973 = vunpack.c.l.b16 %v187
    %v974 = vunpack.c.h.b16 %v187
    %v975 = vunpack.c.l.b16 %v188
    %v976 = vunpack.c.h.b16 %v188
    %v977 = vunpack.c.l.b16 %v189
    %v978 = vunpack.c.l.b16 %v190
    %v979 = vunpack.c.h.b16 %v190
    %v980 = vunpack.c.l.b16 %v191
    %v981 = vunpack.c.h.b16 %v191
    %v982 = vunpack.c.l.b16 %v192
    %v983 = vunpack.c.l.b16 %v193
    %v984 = vunpack.c.h.b16 %v193
    %v985 = vunpack.c.l.b16 %v194
    %v986 = vunpack.c.h.b16 %v194
    %v987 = vunpack.c.l.b16 %v195
    %v988 = vunpack.c.l.b16 %v196
    %v989 = vunpack.c.h.b16 %v196
    %v990 = vunpack.c.l.b16 %v197
    %v991 = vunpack.c.h.b16 %v197
    %v992 = vunpack.c.l.b16 %v198
    %v993 = vunpack.c.l.b16 %v199
    %v994 = vunpack.c.h.b16 %v199
    %v995 = vunpack.c.l.b16 %v200
    %v996 = vunpack.c.h.b16 %v200
    %v997 = vunpack.c.l.b16 %v201
    %v998 = vunpack.c.l.b16 %v202
    %v999 = vunpack.c.h.b16 %v202
    %v1000 = vunpack.c.l.b16 %v203
    %v1001 = vunpack.c.h.b16 %v203
    %v1002 = vunpack.c.l.b16 %v204
    %v1003 = vunpack.c.l.b16 %v205
    %v1004 = vunpack.c.h.b16 %v205
    %v1005 = vunpack.c.l.b16 %v206
    %v1006 = vunpack.c.h.b16 %v206
    %v1007 = vunpack.c.l.b16 %v207
    %v1008 = vunpack.c.l.b16 %v208
    %v1009 = vunpack.c.h.b16 %v208
    %v1010 = vunpack.c.l.b16 %v209
    %v1011 = vunpack.c.h.b16 %v209
    %v1012 = vunpack.c.l.b16 %v210
    %v1013 = vunpack.c.l.b16 %v211
    %v1014 = vunpack.c.h.b16 %v211
    %v1015 = vunpack.c.l.b16 %v212
    %v1016 = vunpack.c.h.b16 %v212
    %v1017 = vunpack.c.l.b16 %v213
    %v1018 = vunpack.c.l.b16 %v214
    %v1019 = vunpack.c.h.b16 %v214
    %v1020 = vunpack.c.l.b16 %v215
    %v1021 = vunpack.c.h.b16 %v215
    %v1022 = vunpack.c.l.b16 %v216
    %v1023 = vunpack.c.l.b16 %v217
    %v1024 = vunpack.c.h.b16 %v217
    %v1025 = vunpack.c.l.b16 %v218
    %v1026 = vunpack.c.h.b16 %v218
    %v1027 = vunpack.c.l.b16 %v219
    %v1028 = vunpack.c.l.b16 %v220
    %v1029 = vunpack.c.h.b16 %v220
    %v1030 = vunpack.c.l.b16 %v221
    %v1031 = vunpack.c.h.b16 %v221
    %v1032 = vunpack.c.l.b16 %v222
    %v1033 = vunpack.c.l.b16 %v223
    %v1034 = vunpack.c.h.b16 %v223
    %v1035 = vunpack.c.l.b16 %v224
    %v1036 = vunpack.c.h.b16 %v224
    %v1037 = vunpack.c.l.b16 %v225
    %v1038 = vunpack.c.l.b16 %v226
    %v1039 = vunpack.c.h.b16 %v226
    %v1040 = vunpack.c.l.b16 %v227
    %v1041 = vunpack.c.h.b16 %v227
    %v1042 = vunpack.c.l.b16 %v228
    %v1043 = vunpack.c.l.b16 %v229
    %v1044 = vunpack.c.h.b16 %v229
    %v1045 = vunpack.c.l.b16 %v230
    %v1046 = vunpack.c.h.b16 %v230
    %v1047 = vunpack.c.l.b16 %v231
    %v1048 = vunpack.c.l.b16 %v232
    %v1049 = vunpack.c.h.b16 %v232
    %v1050 = vunpack.c.l.b16 %v233
    %v1051 = vunpack.c.h.b16 %v233
    %v1052 = vunpack.c.l.b16 %v234
    %v1053 = vunpack.c.l.b16 %v235
    %v1054 = vunpack.c.h.b16 %v235
    %v1055 = vunpack.c.l.b16 %v236
    %v1056 = vunpack.c.h.b16 %v236
    %v1057 = vunpack.c.l.b16 %v237
    %v1058 = vunpack.c.l.b16 %v238
    %v1059 = vunpack.c.h.b16 %v238
    %v1060 = vunpack.c.l.b16 %v239
    %v1061 = vunpack.c.h.b16 %v239
    %v1062 = vunpack.c.l.b16 %v240
    %v1063 = vunpack.c.l.b16 %v241
    %v1064 = vunpack.c.h.b16 %v241
    %v1065 = vunpack.c.l.b16 %v242
    %v1066 = vunpack.c.h.b16 %v242
    %v1067 = vunpack.c.l.b16 %v243
    %v1068 = vunpack.c.l.b16 %v244
    %v1069 = vunpack.c.h.b16 %v244
    %v1070 = vunpack.c.l.b16 %v245
    %v1071 = vunpack.c.h.b16 %v245
    %v1072 = vunpack.c.l.b16 %v246
    %v1073 = vunpack.c.l.b16 %v247
    %v1074 = vunpack.c.h.b16 %v247
    %v1075 = vunpack.c.l.b16 %v248
    %v1076 = vunpack.c.h.b16 %v248
    %v1077 = vunpack.c.l.b16 %v249
    %v1078 = vunpack.c.l.b16 %v250
    %v1079 = vunpack.c.h.b16 %v250
    %v1080 = vunpack.c.l.b16 %v251
    %v1081 = vunpack.c.h.b16 %v251
    %v1082 = vunpack.c.l.b16 %v252
    %v1083 = vunpack.c.l.b16 %v253
    %v1084 = vunpack.c.h.b16 %v253
    %v1085 = vunpack.c.l.b16 %v254
    %v1086 = vunpack.c.h.b16 %v254
    %v1087 = vunpack.c.l.b16 %v255
    %v1088 = vunpack.c.l.b16 %v256
    %v1089 = vunpack.c.h.b16 %v256
    %v1090 = vunpack.c.l.b16 %v257
    %v1091 = vunpack.c.h.b16 %v257
    %v1092 = vunpack.c.l.b16 %v258
    %v1093 = vunpack.c.l.b16 %v259
    %v1094 = vunpack.c.h.b16 %v259
    %v1095 = vunpack.c.l.b16 %v260
    %v1096 = vunpack.c.h.b16 %v260
    %v1097 = vunpack.c.l.b16 %v261
    %v1098 = vunpack.c.l.b16 %v262
    %v1099 = vunpack.c.h.b16 %v262
    %v1100 = vunpack.c.l.b16 %v263
    %v1101 = vunpack.c.h.b16 %v263
    %v1102 = vunpack.c.l.b16 %v264
    %v1103 = vunpack.c.l.b16 %v265
    %v1104 = vunpack.c.h.b16 %v265
    %v1105 = vunpack.c.l.b16 %v266
    %v1106 = vunpack.c.h.b16 %v266
    %v1107 = vunpack.c.l.b16 %v267
    %v1108 = vunpack.c.l.b16 %v268
    %v1109 = vunpack.c.h.b16 %v268
    %v1110 = vunpack.c.l.b16 %v269
    %v1111 = vunpack.c.h.b16 %v269
    %v1112 = vunpack.c.l.b16 %v270
    %v1113 = vunpack.c.l.b16 %v271
    %v1114 = vunpack.c.h.b16 %v271
    %v1115 = vunpack.c.l.b16 %v272
    %v1116 = vunpack.c.h.b16 %v272
    %v1117 = vunpack.c.l.b16 %v273
    %v1118 = vunpack.c.l.b16 %v274
    %v1119 = vunpack.c.h.b16 %v274
    %v1120 = vunpack.c.l.b16 %v275
    %v1121 = vunpack.c.h.b16 %v275
    %v1122 = vunpack.c.l.b16 %v276
    %v1123 = vunpack.c.l.b16 %v277
    %v1124 = vunpack.c.h.b16 %v277
    %v1125 = vunpack.c.l.b16 %v278
    %v1126 = vunpack.c.h.b16 %v278
    %v1127 = vunpack.c.l.b16 %v279
    %v1128 = vunpack.c.l.b16 %v280
    %v1129 = vunpack.c.h.b16 %v280
    %v1130 = vunpack.c.l.b16 %v281
    %v1131 = vunpack.c.h.b16 %v281
    %v1132 = vunpack.c.l.b16 %v282
    %v1133 = vunpack.c.l.b16 %v283
    %v1134 = vunpack.c.h.b16 %v283
    %v1135 = vunpack.c.l.b16 %v284
    %v1136 = vunpack.c.h.b16 %v284
    %v1137 = vunpack.c.l.b16 %v285
    %v1138 = vunpack.c.l.b16 %v286
    %v1139 = vunpack.c.h.b16 %v286
    %v1140 = vunpack.c.l.b16 %v287
    %v1141 = vunpack.c.h.b16 %v287
    %v1142 = vunpack.c.l.b16 %v288
    %v1143 = vunpack.c.l.b16 %v289
    %v1144 = vunpack.c.h.b16 %v289
    %v1145 = vunpack.c.l.b16 %v290
    %v1146 = vunpack.c.h.b16 %v290
    %v1147 = vunpack.c.l.b16 %v291
    %v1148 = vunpack.c.l.b16 %v292
    %v1149 = vunpack.c.h.b16 %v292
    %v1150 = vunpack.c.l.b16 %v293
    %v1151 = vunpack.c.h.b16 %v293
    %v1152 = vunpack.c.l.b16 %v294
    %v1153 = vunpack.c.l.b16 %v295
    %v1154 = vunpack.c.h.b16 %v295
    %v1155 = vunpack.c.l.b16 %v296
    %v1156 = vunpack.c.h.b16 %v296
    %v1157 = vunpack.c.l.b16 %v297
    %v1158 = vunpack.c.l.b16 %v298
    %v1159 = vunpack.c.h.b16 %v298
    %v1160 = vunpack.c.l.b16 %v299
    %v1161 = vunpack.c.h.b16 %v299
    %v1162 = vunpack.c.l.b16 %v300
    %v1163 = vunpack.c.l.b16 %v301
    %v1164 = vunpack.c.h.b16 %v301
    %v1165 = vunpack.c.l.b16 %v302
    %v1166 = vunpack.c.h.b16 %v302
    %v1167 = vunpack.c.l.b16 %v303
    %v1168 = vunpack.c.l.b16 %v304
    %v1169 = vunpack.c.h.b16 %v304
    %v1170 = vunpack.c.l.b16 %v305
    %v1171 = vunpack.c.h.b16 %v305
    %v1172 = vunpack.c.l.b16 %v306
    %v1173 = vunpack.c.l.b16 %v307
    %v1174 = vunpack.c.h.b16 %v307
    %v1175 = vunpack.c.l.b16 %v308
    %v1176 = vunpack.c.h.b16 %v308
    %v1177 = vunpack.c.l.b16 %v309
    %v1178 = vunpack.c.l.b16 %v310
    %v1179 = vunpack.c.h.b16 %v310
    %v1180 = vunpack.c.l.b16 %v311
    %v1181 = vunpack.c.h.b16 %v311
    %v1182 = vunpack.c.l.b16 %v312
    %v1183 = vunpack.c.l.b16 %v313
    %v1184 = vunpack.c.h.b16 %v313
    %v1185 = vunpack.c.l.b16 %v314
    %v1186 = vunpack.c.h.b16 %v314
    %v1187 = vunpack.c.l.b16 %v315
    %v1188 = vunpack.c.l.b16 %v316
    %v1189 = vunpack.c.h.b16 %v316
    %v1190 = vunpack.c.l.b16 %v317
    %v1191 = vunpack.c.h.b16 %v317
    %v1192 = vunpack.c.l.b16 %v318
    %v1193 = vunpack.c.l.b16 %v319
    %v1194 = vunpack.c.h.b16 %v319
    %v1195 = vunpack.c.l.b16 %v320
    %v1196 = vunpack.c.h.b16 %v320
    %v1197 = vunpack.c.l.b16 %v321
    %v1198 = vunpack.c.l.b16 %v322
    %v1199 = vunpack.c.h.b16 %v322
    %v1200 = vunpack.c.l.b16 %v323
    %v1201 = vunpack.c.h.b16 %v323
    %v1202 = vunpack.c.l.b16 %v324
    %v1203 = vunpack.c.l.b16 %v325
    %v1204 = vunpack.c.h.b16 %v325
    %v1205 = vunpack.c.l.b16 %v326
    %v1206 = vunpack.c.h.b16 %v326
    %v1207 = vunpack.c.l.b16 %v327
    %v1208 = vunpack.c.l.b16 %v328
    %v1209 = vunpack.c.h.b16 %v328
    %v1210 = vunpack.c.l.b16 %v329
    %v1211 = vunpack.c.h.b16 %v329
    %v1212 = vunpack.c.l.b16 %v330
    %v1213 = vunpack.c.l.b16 %v331
    %v1214 = vunpack.c.h.b16 %v331
    %v1215 = vunpack.c.l.b16 %v332
    %v1216 = vunpack.c.h.b16 %v332
    %v1217 = vunpack.c.l.b16 %v333
    %v1218 = vunpack.c.l.b16 %v334
    %v1219 = vunpack.c.h.b16 %v334
    %v1220 = vunpack.c.l.b16 %v335
    %v1221 = vunpack.c.h.b16 %v335
    %v1222 = vunpack.c.l.b16 %v336
    %v1223 = vunpack.c.l.b16 %v337
    %v1224 = vunpack.c.h.b16 %v337
    %v1225 = vunpack.c.l.b16 %v338
    %v1226 = vunpack.c.h.b16 %v338
    %v1227 = vunpack.c.l.b16 %v339
    %v1228 = vunpack.c.l.b16 %v340
    %v1229 = vunpack.c.h.b16 %v340
    %v1230 = vunpack.c.l.b16 %v341
    %v1231 = vunpack.c.h.b16 %v341
    %v1232 = vunpack.c.l.b16 %v342
    %v1233 = vunpack.c.l.b16 %v343
    %v1234 = vunpack.c.h.b16 %v343
    %v1235 = vunpack.c.l.b16 %v344
    %v1236 = vunpack.c.h.b16 %v344
    %v1237 = vunpack.c.l.b16 %v345
    %v1238 = vunpack.c.l.b16 %v346
    %v1239 = vunpack.c.h.b16 %v346
    %v1240 = vunpack.c.l.b16 %v347
    %v1241 = vunpack.c.h.b16 %v347
    %v1242 = vunpack.c.l.b16 %v348
    %v1243 = vunpack.c.l.b16 %v349
    %v1244 = vunpack.c.h.b16 %v349
    %v1245 = vunpack.c.l.b16 %v350
    %v1246 = vunpack.c.h.b16 %v350
    %v1247 = vunpack.c.l.b16 %v351
    %v1248 = vunpack.c.l.b16 %v352
    %v1249 = vunpack.c.h.b16 %v352
    %v1250 = vunpack.c.l.b16 %v353
    %v1251 = vunpack.c.h.b16 %v353
    %v1252 = vunpack.c.l.b16 %v354
    %v1253 = vunpack.c.l.b16 %v355
    %v1254 = vunpack.c.h.b16 %v355
    %v1255 = vunpack.c.l.b16 %v356
    %v1256 = vunpack.c.h.b16 %v356
    %v1257 = vunpack.c.l.b16 %v357
    %v1258 = vunpack.c.l.b16 %v358
    %v1259 = vunpack.c.h.b16 %v358
    %v1260 = vunpack.c.l.b16 %v359
    %v1261 = vunpack.c.h.b16 %v359
    %v1262 = vunpack.c.l.b16 %v360
    %v1263 = vunpack.c.l.b16 %v361
    %v1264 = vunpack.c.h.b16 %v361
    %v1265 = vunpack.c.l.b16 %v362
    %v1266 = vunpack.c.h.b16 %v362
    %v1267 = vunpack.c.l.b16 %v363
    %v1268 = vunpack.c.l.b16 %v364
    %v1269 = vunpack.c.h.b16 %v364
    %v1270 = vunpack.c.l.b16 %v365
    %v1271 = vunpack.c.h.b16 %v365
    %v1272 = vunpack.c.l.b16 %v366
    %v1273 = vunpack.c.l.b16 %v367
    %v1274 = vunpack.c.h.b16 %v367
    %v1275 = vunpack.c.l.b16 %v368
    %v1276 = vunpack.c.h.b16 %v368
    %v1277 = vunpack.c.l.b16 %v369
    %v1278 = vunpack.c.l.b16 %v370
    %v1279 = vunpack.c.h.b16 %v370
    %v1280 = vunpack.c.l.b16 %v371
    %v1281 = vunpack.c.h.b16 %v371
    %v1282 = vunpack.c.l.b16 %v372
    %v1283 = vunpack.c.l.b16 %v373
    %v1284 = vunpack.c.h.b16 %v373
    %v1285 = vunpack.c.l.b16 %v374
    %v1286 = vunpack.c.h.b16 %v374
    %v1287 = vunpack.c.l.b16 %v375
    %v1288 = vunpack.c.l.b16 %v376
    %v1289 = vunpack.c.h.b16 %v376
    %v1290 = vunpack.c.l.b16 %v377
    %v1291 = vunpack.c.h.b16 %v377
    %v1292 = vunpack.c.l.b16 %v378
    %v1293 = vunpack.c.l.b16 %v379
    %v1294 = vunpack.c.h.b16 %v379
    %v1295 = vunpack.c.l.b16 %v380
    %v1296 = vunpack.c.h.b16 %v380
    %v1297 = vunpack.c.l.b16 %v381
    %v1298 = vunpack.c.l.b16 %v382
    %v1299 = vunpack.c.h.b16 %v382
    %v1300 = vunpack.c.l.b16 %v383
    %v1301 = vunpack.c.h.b16 %v383
    %v1302 = vunpack.c.l.b16 %v384
    %v1303 = vunpack.c.l.b16 %v385
    %v1304 = vunpack.c.h.b16 %v385
    %v1305 = vunpack.c.l.b16 %v386
    %v1306 = vunpack.c.h.b16 %v386
    %v1307 = vunpack.c.l.b16 %v387
    %v1308 = vunpack.c.l.b16 %v388
    %v1309 = vunpack.c.h.b16 %v388
    %v1310 = vunpack.c.l.b16 %v389
    %v1311 = vunpack.c.h.b16 %v389
    %v1312 = vunpack.c.l.b16 %v390
    %v1313 = vunpack.c.l.b16 %v391
    %v1314 = vunpack.c.h.b16 %v391
    %v1315 = vunpack.c.l.b16 %v392
    %v1316 = vunpack.c.h.b16 %v392
    %v1317 = vunpack.c.l.b16 %v393
    %v1318 = vunpack.c.l.b16 %v394
    %v1319 = vunpack.c.h.b16 %v394
    %v1320 = vunpack.c.l.b16 %v395
    %v1321 = vunpack.c.h.b16 %v395
    %v1322 = vunpack.c.l.b16 %v396
    %v1323 = vunpack.c.l.b16 %v397
    %v1324 = vunpack.c.h.b16 %v397
    %v1325 = vunpack.c.l.b16 %v398
    %v1326 = vunpack.c.h.b16 %v398
    %v1327 = vunpack.c.l.b16 %v399
    %v1328 = vunpack.c.l.b16 %v400
    %v1329 = vunpack.c.h.b16 %v400
    %v1330 = vunpack.c.l.b16 %v401
    %v1331 = vunpack.c.h.b16 %v401
    %v1332 = vunpack.c.l.b16 %v402
    %v1333 = vunpack.c.l.b16 %v403
    %v1334 = vunpack.c.h.b16 %v403
    %v1335 = vunpack.c.l.b16 %v404
    %v1336 = vunpack.c.h.b16 %v404
    %v1337 = vunpack.c.l.b16 %v405
    %v1338 = vunpack.c.l.b16 %v406
    %v1339 = vunpack.c.h.b16 %v406
    %v1340 = vunpack.c.l.b16 %v407
    %v1341 = vunpack.c.h.b16 %v407
    %v1342 = vunpack.c.l.b16 %v408
    %v1343 = vunpack.c.l.b16 %v409
    %v1344 = vunpack.c.h.b16 %v409
    %v1345 = vunpack.c.l.b16 %v410
    %v1346 = vunpack.c.h.b16 %v410
    %v1347 = vunpack.c.l.b16 %v411
    %v1348 = vunpack.c.l.b16 %v412
    %v1349 = vunpack.c.h.b16 %v412
    %v1350 = vunpack.c.l.b16 %v413
    %v1351 = vunpack.c.h.b16 %v413
    %v1352 = vunpack.c.l.b16 %v414
    %v1353 = vunpack.c.l.b16 %v415
    %v1354 = vunpack.c.h.b16 %v415
    %v1355 = vunpack.c.l.b16 %v416
    %v1356 = vunpack.c.h.b16 %v416
    %v1357 = vunpack.c.l.b16 %v417
    %v1358 = vunpack.c.l.b16 %v418
    %v1359 = vunpack.c.h.b16 %v418
    %v1360 = vunpack.c.l.b16 %v419
    %v1361 = vunpack.c.h.b16 %v419
    %v1362 = vunpack.c.l.b16 %v420
    %v1363 = vunpack.c.l.b16 %v421
    %v1364 = vunpack.c.h.b16 %v421
    %v1365 = vunpack.c.l.b16 %v422
    %v1366 = vunpack.c.h.b16 %v422
    %v1367 = vunpack.c.l.b16 %v423
    %v1368 = vunpack.c.l.b16 %v424
    %v1369 = vunpack.c.h.b16 %v424
    %v1370 = vunpack.c.l.b16 %v425
    %v1371 = vunpack.c.h.b16 %v425
    %v1372 = vunpack.c.l.b16 %v426
    %v1373 = vunpack.c.l.b16 %v427
    %v1374 = vunpack.c.h.b16 %v427
    %v1375 = vunpack.c.l.b16 %v428
    %v1376 = vunpack.c.h.b16 %v428
    %v1377 = vunpack.c.l.b16 %v429
    %v1378 = vpack.c.b16 %v823, %v818
    %v1379 = vpack.c.b16 %v824, %v819
    %v1380 = vpack.c.b16 %v825, %v820
    %v1381 = vpack.c.b16 %v826, %v821
    %v1382 = vpack.c.b16 %v827, %v822
    %v1383 = vpack.c.b16 %v833, %v828
    %v1384 = vpack.c.b16 %v834, %v829
    %v1385 = vpack.c.b16 %v835, %v830
    %v1386 = vpack.c.b16 %v836, %v831
    %v1387 = vpack.c.b16 %v837, %v832
    %v1388 = vpack.c.b16 %v843, %v838
    %v1389 = vpack.c.b16 %v844, %v839
    %v1390 = vpack.c.b16 %v845, %v840
    %v1391 = vpack.c.b16 %v846, %v841
    %v1392 = vpack.c.b16 %v847, %v842
    %v1393 = vpack.c.b16 %v853, %v848
    %v1394 = vpack.c.b16 %v854, %v849
    %v1395 = vpack.c.b16 %v855, %v850
    %v1396 = vpack.c.b16 %v856, %v851
    %v1397 = vpack.c.b16 %v857, %v852
    %v1398 = vpack.c.b16 %v863, %v858
    %v1399 = vpack.c.b16 %v864, %v859
    %v1400 = vpack.c.b16 %v865, %v860
    %v1401 = vpack.c.b16 %v866, %v861
    %v1402 = vpack.c.b16 %v867, %v862
    %v1403 = vpack.c.b16 %v873, %v868
    %v1404 = vpack.c.b16 %v874, %v869
    %v1405 = vpack.c.b16 %v875, %v870
    %v1406 = vpack.c.b16 %v876, %v871
    %v1407 = vpack.c.b16 %v877, %v872
    %v1408 = vpack.c.b16 %v883, %v878
    %v1409 = vpack.c.b16 %v884, %v879
    %v1410 = vpack.c.b16 %v885, %v880
    %v1411 = vpack.c.b16 %v886, %v881
    %v1412 = vpack.c.b16 %v887, %v882
    %v1413 = vpack.c.b16 %v893, %v888
    %v1414 = vpack.c.b16 %v894, %v889
    %v1415 = vpack.c.b16 %v895, %v890
    %v1416 = vpack.c.b16 %v896, %v891
    %v1417 = vpack.c.b16 %v897, %v892
    %v1418 = vpack.c.b16 %v903, %v898
    %v1419 = vpack.c.b16 %v904, %v899
    %v1420 = vpack.c.b16 %v905, %v900
    %v1421 = vpack.c.b16 %v906, %v901
    %v1422 = vpack.c.b16 %v907, %v902
    %v1423 = vpack.c.b16 %v913, %v908
    %v1424 = vpack.c.b16 %v914, %v909
    %v1425 = vpack.c.b16 %v915, %v910
    %v1426 = vpack.c.b16 %v916, %v911
    %v1427 = vpack.c.b16 %v917, %v912
    %v1428 = vpack.c.b16 %v923, %v918
    %v1429 = vpack.c.b16 %v924, %v919
    %v1430 = vpack.c.b16 %v925, %v920
    %v1431 = vpack.c.b16 %v926, %v921
    %v1432 = vpack.c.b16 %v927, %v922
    %v1433 = vpack.c.b16 %v933, %v928
    %v1434 = vpack.c.b16 %v934, %v929
    %v1435 = vpack.c.b16 %v935, %v930
    %v1436 = vpack.c.b16 %v936, %v931
    %v1437 = vpack.c.b16 %v937, %v932
    %v1438 = vpack.c.b16 %v943, %v938
    %v1439 = vpack.c.b16 %v944, %v939
    %v1440 = vpack.c.b16 %v945, %v940
    %v1441 = vpack.c.b16 %v946, %v941
    %v1442 = vpack.c.b16 %v947, %v942
    %v1443 = vpack.c.b16 %v953, %v948
    %v1444 = vpack.c.b16 %v954, %v949
    %v1445 = vpack.c.b16 %v955, %v950
    %v1446 = vpack.c.b16 %v956, %v951
    %v1447 = vpack.c.b16 %v957, %v952
    %v1448 = vpack.c.b16 %v963, %v958
    %v1449 = vpack.c.b16 %v964, %v959
    %v1450 = vpack.c.b16 %v965, %v960
    %v1451 = vpack.c.b16 %v966, %v961
    %v1452 = vpack.c.b16 %v967, %v962
    %v1453 = vpack.c.b16 %v973, %v968
    %v1454 = vpack.c.b16 %v974, %v969
    %v1455 = vpack.c.b16 %v975, %v970
    %v1456 = vpack.c.b16 %v976, %v971
    %v1457 = vpack.c.b16 %v977, %v972
    %v1458 = vpack.c.b16 %v983, %v978
    %v1459 = vpack.c.b16 %v984, %v979
    %v1460 = vpack.c.b16 %v985, %v980
    %v1461 = vpack.c.b16 %v986, %v981
    %v1462 = vpack.c.b16 %v987, %v982
    %v1463 = vpack.c.b16 %v993, %v988
    %v1464 = vpack.c.b16 %v994, %v989
    %v1465 = vpack.c.b16 %v995, %v990
    %v1466 = vpack.c.b16 %v996, %v991
    %v1467 = vpack.c.b16 %v997, %v992
    %v1468 = vpack.c.b16 %v1003, %v998
    %v1469 = vpack.c.b16 %v1004, %v999
    %v1470 = vpack.c.b16 %v1005, %v1000
    %v1471 = vpack.c.b16 %v1006, %v1001
    %v1472 = vpack.c.b16 %v1007, %v1002
    %v1473 = vpack.c.b16 %v1013, %v1008
    %v1474 = vpack.c.b16 %v1014, %v1009
    %v1475 = vpack.c.b16 %v1015, %v1010
    %v1476 = vpack.c.b16 %v1016, %v1011
    %v1477 = vpack.c.b16 %v1017, %v1012
    %v1478 = vpack.c.b16 %v1023, %v1018
    %v1479 = vpack.c.b16 %v1024, %v1019
    %v1480 = vpack.c.b16 %v1025, %v1020
    %v1481 = vpack.c.b16 %v1026, %v1021
    %v1482 = vpack.c.b16 %v1027, %v1022
    %v1483 = vpack.c.b16 %v1033, %v1028
    %v1484 = vpack.c.b16 %v1034, %v1029
    %v1485 = vpack.c.b16 %v1035, %v1030
    %v1486 = vpack.c.b16 %v1036, %v1031
    %v1487 = vpack.c.b16 %v1037, %v1032
    %v1488 = vpack.c.b16 %v1043, %v1038
    %v1489 = vpack.c.b16 %v1044, %v1039
    %v1490 = vpack.c.b16 %v1045, %v1040
    %v1491 = vpack.c.b16 %v1046, %v1041
    %v1492 = vpack.c.b16 %v1047, %v1042
    %v1493 = vpack.c.b16 %v1053, %v1048
    %v1494 = vpack.c.b16 %v1054, %v1049
    %v1495 = vpack.c.b16 %v1055, %v1050
    %v1496 = vpack.c.b16 %v1056, %v1051
    %v1497 = vpack.c.b16 %v1057, %v1052
    %v1498 = vpack.c.b16 %v1063, %v1058
    %v1499 = vpack.c.b16 %v1064, %v1059
    %v1500 = vpack.c.b16 %v1065, %v1060
    %v1501 = vpack.c.b16 %v1066, %v1061
    %v1502 = vpack.c.b16 %v1067, %v1062
    %v1503 = vpack.c.b16 %v1073, %v1068
    %v1504 = vpack.c.b16 %v1074, %v1069
    %v1505 = vpack.c.b16 %v1075, %v1070
    %v1506 = vpack.c.b16 %v1076, %v1071
    %v1507 = vpack.c.b16 %v1077, %v1072
    %v1508 = vpack.c.b16 %v1083, %v1078
    %v1509 = vpack.c.b16 %v1084, %v1079
    %v1510 = vpack.c.b16 %v1085, %v1080
    %v1511 = vpack.c.b16 %v1086, %v1081
    %v1512 = vpack.c.b16 %v1087, %v1082
    %v1513 = vpack.c.b16 %v1093, %v1088
    %v1514 = vpack.c.b16 %v1094, %v1089
    %v1515 = vpack.c.b16 %v1095, %v1090
    %v1516 = vpack.c.b16 %v1096, %v1091
    %v1517 = vpack.c.b16 %v1097, %v1092
    %v1518 = vpack.c.b16 %v1103, %v1098
    %v1519 = vpack.c.b16 %v1104, %v1099
    %v1520 = vpack.c.b16 %v1105, %v1100
    %v1521 = vpack.c.b16 %v1106, %v1101
    %v1522 = vpack.c.b16 %v1107, %v1102
    %v1523 = vpack.c.b16 %v1113, %v1108
    %v1524 = vpack.c.b16 %v1114, %v1109
    %v1525 = vpack.c.b16 %v1115, %v1110
    %v1526 = vpack.c.b16 %v1116, %v1111
    %v1527 = vpack.c.b16 %v1117, %v1112
    %v1528 = vpack.c.b16 %v1123, %v1118
    %v1529 = vpack.c.b16 %v1124, %v1119
    %v1530 = vpack.c.b16 %v1125, %v1120
    %v1531 = vpack.c.b16 %v1126, %v1121
    %v1532 = vpack.c.b16 %v1127, %v1122
    %v1533 = vpack.c.b16 %v1133, %v1128
    %v1534 = vpack.c.b16 %v1134, %v1129
    %v1535 = vpack.c.b16 %v1135, %v1130
    %v1536 = vpack.c.b16 %v1136, %v1131
    %v1537 = vpack.c.b16 %v1137, %v1132
    %v1538 = vpack.c.b16 %v1143, %v1138
    %v1539 = vpack.c.b16 %v1144, %v1139
    %v1540 = vpack.c.b16 %v1145, %v1140
    %v1541 = vpack.c.b16 %v1146, %v1141
    %v1542 = vpack.c.b16 %v1147, %v1142
    %v1543 = vpack.c.b16 %v1153, %v1148
    %v1544 = vpack.c.b16 %v1154, %v1149
    %v1545 = vpack.c.b16 %v1155, %v1150
    %v1546 = vpack.c.b16 %v1156, %v1151
    %v1547 = vpack.c.b16 %v1157, %v1152
    %v1548 = vpack.c.b16 %v1163, %v1158
    %v1549 = vpack.c.b16 %v1164, %v1159
    %v1550 = vpack.c.b16 %v1165, %v1160
    %v1551 = vpack.c.b16 %v1166, %v1161
    %v1552 = vpack.c.b16 %v1167, %v1162
    %v1553 = vpack.c.b16 %v1173, %v1168
    %v1554 = vpack.c.b16 %v1174, %v1169
    %v1555 = vpack.c.b16 %v1175, %v1170
    %v1556 = vpack.c.b16 %v1176, %v1171
    %v1557 = vpack.c.b16 %v1177, %v1172
    %v1558 = vpack.c.b16 %v1183, %v1178
    %v1559 = vpack.c.b16 %v1184, %v1179
    %v1560 = vpack.c.b16 %v1185, %v1180
    %v1561 = vpack.c.b16 %v1186, %v1181
    %v1562 = vpack.c.b16 %v1187, %v1182
    %v1563 = vpack.c.b16 %v1193, %v1188
    %v1564 = vpack.c.b16 %v1194, %v1189
    %v1565 = vpack.c.b16 %v1195, %v1190
    %v1566 = vpack.c.b16 %v1196, %v1191
    %v1567 = vpack.c.b16 %v1197, %v1192
    %v1568 = vpack.c.b16 %v1203, %v1198
    %v1569 = vpack.c.b16 %v1204, %v1199
    %v1570 = vpack.c.b16 %v1205, %v1200
    %v1571 = vpack.c.b16 %v1206, %v1201
    %v1572 = vpack.c.b16 %v1207, %v1202
    %v1573 = vpack.c.b16 %v1213, %v1208
    %v1574 = vpack.c.b16 %v1214, %v1209
    %v1575 = vpack.c.b16 %v1215, %v1210
    %v1576 = vpack.c.b16 %v1216, %v1211
    %v1577 = vpack.c.b16 %v1217, %v1212
    %v1578 = vpack.c.b16 %v1223, %v1218
    %v1579 = vpack.c.b16 %v1224, %v1219
    %v1580 = vpack.c.b16 %v1225, %v1220
    %v1581 = vpack.c.b16 %v1226, %v1221
    %v1582 = vpack.c.b16 %v1227, %v1222
    %v1583 = vpack.c.b16 %v1233, %v1228
    %v1584 = vpack.c.b16 %v1234, %v1229
    %v1585 = vpack.c.b16 %v1235, %v1230
    %v1586 = vpack.c.b16 %v1236, %v1231
    %v1587 = vpack.c.b16 %v1237, %v1232
    %v1588 = vpack.c.b16 %v1243, %v1238
    %v1589 = vpack.c.b16 %v1244, %v1239
    %v1590 = vpack.c.b16 %v1245, %v1240
    %v1591 = vpack.c.b16 %v1246, %v1241
    %v1592 = vpack.c.b16 %v1247, %v1242
    %v1593 = vpack.c.b16 %v1253, %v1248
    %v1594 = vpack.c.b16 %v1254, %v1249
    %v1595 = vpack.c.b16 %v1255, %v1250
    %v1596 = vpack.c.b16 %v1256, %v1251
    %v1597 = vpack.c.b16 %v1257, %v1252
    %v1598 = vpack.c.b16 %v1263, %v1258
    %v1599 = vpack.c.b16 %v1264, %v1259
    %v1600 = vpack.c.b16 %v1265, %v1260
    %v1601 = vpack.c.b16 %v1266, %v1261
    %v1602 = vpack.c.b16 %v1267, %v1262
    %v1603 = vpack.c.b16 %v1273, %v1268
    %v1604 = vpack.c.b16 %v1274, %v1269
    %v1605 = vpack.c.b16 %v1275, %v1270
    %v1606 = vpack.c.b16 %v1276, %v1271
    %v1607 = vpack.c.b16 %v1277, %v1272
    %v1608 = vpack.c.b16 %v1283, %v1278
    %v1609 = vpack.c.b16 %v1284, %v1279
    %v1610 = vpack.c.b16 %v1285, %v1280
    %v1611 = vpack.c.b16 %v1286, %v1281
    %v1612 = vpack.c.b16 %v1287, %v1282
    %v1613 = vpack.c.b16 %v1293, %v1288
    %v1614 = vpack.c.b16 %v1294, %v1289
    %v1615 = vpack.c.b16 %v1295, %v1290
    %v1616 = vpack.c.b16 %v1296, %v1291
    %v1617 = vpack.c.b16 %v1297, %v1292
    %v1618 = vpack.c.b16 %v1303, %v1298
    %v1619 = vpack.c.b16 %v1304, %v1299
    %v1620 = vpack.c.b16 %v1305, %v1300
    %v1621 = vpack.c.b16 %v1306, %v1301
    %v1622 = vpack.c.b16 %v1307, %v1302
    %v1623 = vpack.c.b16 %v1313, %v1308
    %v1624 = vpack.c.b16 %v1314, %v1309
    %v1625 = vpack.c.b16 %v1315, %v1310
    %v1626 = vpack.c.b16 %v1316, %v1311
    %v1627 = vpack.c.b16 %v1317, %v1312
    %v1628 = vpack.c.b16 %v1323, %v1318
    %v1629 = vpack.c.b16 %v1324, %v1319
    %v1630 = vpack.c.b16 %v1325, %v1320
    %v1631 = vpack.c.b16 %v1326, %v1321
    %v1632 = vpack.c.b16 %v1327, %v1322
    %v1633 = vpack.c.b16 %v1333, %v1328
    %v1634 = vpack.c.b16 %v1334, %v1329
    %v1635 = vpack.c.b16 %v1335, %v1330
    %v1636 = vpack.c.b16 %v1336, %v1331
    %v1637 = vpack.c.b16 %v1337, %v1332
    %v1638 = vpack.c.b16 %v1343, %v1338
    %v1639 = vpack.c.b16 %v1344, %v1339
    %v1640 = vpack.c.b16 %v1345, %v1340
    %v1641 = vpack.c.b16 %v1346, %v1341
    %v1642 = vpack.c.b16 %v1347, %v1342
    %v1643 = vpack.c.b16 %v1353, %v1348
    %v1644 = vpack.c.b16 %v1354, %v1349
    %v1645 = vpack.c.b16 %v1355, %v1350
    %v1646 = vpack.c.b16 %v1356, %v1351
    %v1647 = vpack.c.b16 %v1357, %v1352
    %v1648 = vpack.c.b16 %v1363, %v1358
    %v1649 = vpack.c.b16 %v1364, %v1359
    %v1650 = vpack.c.b16 %v1365, %v1360
    %v1651 = vpack.c.b16 %v1366, %v1361
    %v1652 = vpack.c.b16 %v1367, %v1362
    %v1653 = vpack.c.b16 %v1373, %v1368
    %v1654 = vpack.c.b16 %v1374, %v1369
    %v1655 = vpack.c.b16 %v1375, %v1370
    %v1656 = vpack.c.b16 %v1376, %v1371
    %v1657 = vpack.c.b16 %v1377, %v1372
    %1938 = vmatprep.subr.bf16.mxu0 %v1414
    %1939 = vmatpush1.bf16.msra.mxu0 %v1413
    %1940 = vmatprep.subr.bf16.mxu0 %v1409
    %1941 = vmatpush1.bf16.msra.mxu0 %v1408
    %1942 = vmatprep.subr.bf16.mxu0 %v1404
    %1943 = vmatpush1.bf16.msra.mxu0 %v1403
    %1944 = vmatprep.subr.bf16.mxu0 %v1399
    %1945 = vmatpush1.bf16.msra.mxu0 %v1398
    %1946 = vmatprep.subr.bf16.mxu0 %v1394
    %1947 = vmatpush1.bf16.msra.mxu0 %v1393
    %1948 = vmatprep.subr.bf16.mxu0 %v1389
    %1949 = vmatpush1.bf16.msra.mxu0 %v1388
    %1950 = vmatprep.subr.bf16.mxu0 %v1384
    %1951 = vmatpush1.bf16.msra.mxu0 %v1383
    %1952 = vmatprep.subr.bf16.mxu0 %v1379
    %1953 = vmatpush1.bf16.msra.mxu0 %v1378
    %1954 = vmatprep.subr.bf16.mxu0 %v1454
    %1955 = vmatpush2.bf16.msra.mxu0 %v1453
    %1956 = vmatprep.subr.bf16.mxu0 %v1449
    %1957 = vmatpush2.bf16.msra.mxu0 %v1448
    %1958 = vmatprep.subr.bf16.mxu0 %v1444
    %1959 = vmatpush2.bf16.msra.mxu0 %v1443
    %1960 = vmatprep.subr.bf16.mxu0 %v1439
    %1961 = vmatpush2.bf16.msra.mxu0 %v1438
    %1962 = vmatprep.subr.bf16.mxu0 %v1434
    %1963 = vmatpush2.bf16.msra.mxu0 %v1433
    %1964 = vmatprep.subr.bf16.mxu0 %v1429
    %1965 = vmatpush2.bf16.msra.mxu0 %v1428
    %1966 = vmatprep.subr.bf16.mxu0 %v1424
    %1967 = vmatpush2.bf16.msra.mxu0 %v1423
    %1968 = vmatprep.subr.bf16.mxu0 %v1419
    %1969 = vmatpush2.bf16.msra.mxu0 %v1418
    %1970 = vmatprep.mubr.bf16.mxu0 %v469
    %1971 = vmatmul.mubr.bf16.gmra.mxu0 %v468
    %v1972 = vpop.f32.mrf.mxu0
    %v1973 = vadd.f32 %v435, %v1972
    %v1974 = vpop.f32.mrf.mxu0
    %v1975 = vadd.f32 %v439, %v1974
    %v1976 = vpop.f32.mrf.mxu0
    %v1977 = vpop.f32.mrf.mxu0
    %1978 = vdwg.mxu0
    %1979 = vmatprep.subr.bf16.mxu0 %v1494
    %1980 = vmatpush1.bf16.msra.mxu0 %v1493
    %1981 = vmatprep.subr.bf16.mxu0 %v1489
    %1982 = vmatpush1.bf16.msra.mxu0 %v1488
    %1983 = vmatprep.subr.bf16.mxu0 %v1484
    %1984 = vmatpush1.bf16.msra.mxu0 %v1483
    %1985 = vmatprep.subr.bf16.mxu0 %v1479
    %1986 = vmatpush1.bf16.msra.mxu0 %v1478
    %1987 = vmatprep.subr.bf16.mxu0 %v1474
    %1988 = vmatpush1.bf16.msra.mxu0 %v1473
    %1989 = vmatprep.subr.bf16.mxu0 %v1469
    %1990 = vmatpush1.bf16.msra.mxu0 %v1468
    %1991 = vmatprep.subr.bf16.mxu0 %v1464
    %1992 = vmatpush1.bf16.msra.mxu0 %v1463
    %1993 = vmatprep.subr.bf16.mxu0 %v1459
    %1994 = vmatpush1.bf16.msra.mxu0 %v1458
    %1995 = vmatprep.subr.bf16.mxu0 %v1534
    %1996 = vmatpush2.bf16.msra.mxu0 %v1533
    %1997 = vmatprep.subr.bf16.mxu0 %v1529
    %1998 = vmatpush2.bf16.msra.mxu0 %v1528
    %1999 = vmatprep.subr.bf16.mxu0 %v1524
    %2000 = vmatpush2.bf16.msra.mxu0 %v1523
    %2001 = vmatprep.subr.bf16.mxu0 %v1519
    %2002 = vmatpush2.bf16.msra.mxu0 %v1518
    %2003 = vmatprep.subr.bf16.mxu0 %v1514
    %2004 = vmatpush2.bf16.msra.mxu0 %v1513
    %2005 = vmatprep.subr.bf16.mxu0 %v1509
    %2006 = vmatpush2.bf16.msra.mxu0 %v1508
    %2007 = vmatprep.subr.bf16.mxu0 %v1504
    %2008 = vmatpush2.bf16.msra.mxu0 %v1503
    %2009 = vmatprep.subr.bf16.mxu0 %v1499
    %2010 = vmatpush2.bf16.msra.mxu0 %v1498
    %2011 = vmatprep.mubr.bf16.mxu0 %v471
    %2012 = vmatmul.mubr.bf16.gmra.mxu0 %v470
    %v2013 = vpop.f32.mrf.mxu0
    %v2014 = vadd.f32 %v1973, %v2013
    %v2015 = vpop.f32.mrf.mxu0
    %v2016 = vadd.f32 %v1975, %v2015
    %v2017 = vpop.f32.mrf.mxu0
    %v2018 = vpop.f32.mrf.mxu0
    %2019 = vdwg.mxu0
    %2020 = vmatprep.subr.bf16.mxu0 %v1574
    %2021 = vmatpush1.bf16.msra.mxu0 %v1573
    %2022 = vmatprep.subr.bf16.mxu0 %v1569
    %2023 = vmatpush1.bf16.msra.mxu0 %v1568
    %2024 = vmatprep.subr.bf16.mxu0 %v1564
    %2025 = vmatpush1.bf16.msra.mxu0 %v1563
    %2026 = vmatprep.subr.bf16.mxu0 %v1559
    %2027 = vmatpush1.bf16.msra.mxu0 %v1558
    %2028 = vmatprep.subr.bf16.mxu0 %v1554
    %2029 = vmatpush1.bf16.msra.mxu0 %v1553
    %2030 = vmatprep.subr.bf16.mxu0 %v1549
    %2031 = vmatpush1.bf16.msra.mxu0 %v1548
    %2032 = vmatprep.subr.bf16.mxu0 %v1544
    %2033 = vmatpush1.bf16.msra.mxu0 %v1543
    %2034 = vmatprep.subr.bf16.mxu0 %v1539
    %2035 = vmatpush1.bf16.msra.mxu0 %v1538
    %2036 = vmatprep.subr.bf16.mxu0 %v1614
    %2037 = vmatpush2.bf16.msra.mxu0 %v1613
    %2038 = vmatprep.subr.bf16.mxu0 %v1609
    %2039 = vmatpush2.bf16.msra.mxu0 %v1608
    %2040 = vmatprep.subr.bf16.mxu0 %v1604
    %2041 = vmatpush2.bf16.msra.mxu0 %v1603
    %2042 = vmatprep.subr.bf16.mxu0 %v1599
    %2043 = vmatpush2.bf16.msra.mxu0 %v1598
    %2044 = vmatprep.subr.bf16.mxu0 %v1594
    %2045 = vmatpush2.bf16.msra.mxu0 %v1593
    %2046 = vmatprep.subr.bf16.mxu0 %v1589
    %2047 = vmatpush2.bf16.msra.mxu0 %v1588
    %2048 = vmatprep.subr.bf16.mxu0 %v1584
    %2049 = vmatpush2.bf16.msra.mxu0 %v1583
    %2050 = vmatprep.subr.bf16.mxu0 %v1579
    %2051 = vmatpush2.bf16.msra.mxu0 %v1578
    %2052 = vmatprep.mubr.bf16.mxu0 %v473
    %2053 = vmatmul.mubr.bf16.gmra.mxu0 %v472
    %v2054 = vpop.f32.mrf.mxu0
    %v2055 = vadd.f32 %v2014, %v2054
    %v2056 = vpop.f32.mrf.mxu0
    %v2057 = vadd.f32 %v2016, %v2056
    %v2058 = vpop.f32.mrf.mxu0
    %v2059 = vpop.f32.mrf.mxu0
    %2060 = vdwg.mxu0
    %2061 = vmatprep.subr.bf16.mxu0 %v1654
    %2062 = vmatpush1.bf16.msra.mxu0 %v1653
    %2063 = vmatprep.subr.bf16.mxu0 %v1649
    %2064 = vmatpush1.bf16.msra.mxu0 %v1648
    %2065 = vmatprep.subr.bf16.mxu0 %v1644
    %2066 = vmatpush1.bf16.msra.mxu0 %v1643
    %2067 = vmatprep.subr.bf16.mxu0 %v1639
    %2068 = vmatpush1.bf16.msra.mxu0 %v1638
    %2069 = vmatprep.subr.bf16.mxu0 %v1634
    %2070 = vmatpush1.bf16.msra.mxu0 %v1633
    %2071 = vmatprep.subr.bf16.mxu0 %v1629
    %2072 = vmatpush1.bf16.msra.mxu0 %v1628
    %2073 = vmatprep.subr.bf16.mxu0 %v1624
    %2074 = vmatpush1.bf16.msra.mxu0 %v1623
    %2075 = vmatprep.subr.bf16.mxu0 %v1619
    %2076 = vmatpush1.bf16.msra.mxu0 %v1618
    %2077 = vmatprep.subr.bf16.mxu0 0
    %2078 = vmatpush2.bf16.msra.mxu0 0
    %2079 = vmatprep.subr.bf16.mxu0 0
    %2080 = vmatpush2.bf16.msra.mxu0 0
    %2081 = vmatprep.subr.bf16.mxu0 0
    %2082 = vmatpush2.bf16.msra.mxu0 0
    %2083 = vmatprep.subr.bf16.mxu0 0
    %2084 = vmatpush2.bf16.msra.mxu0 0
    %2085 = vmatprep.subr.bf16.mxu0 0
    %2086 = vmatpush2.bf16.msra.mxu0 0
    %2087 = vmatprep.subr.bf16.mxu0 0
    %2088 = vmatpush2.bf16.msra.mxu0 0
    %2089 = vmatprep.subr.bf16.mxu0 0
    %2090 = vmatpush2.bf16.msra.mxu0 0
    %2091 = vmatprep.subr.bf16.mxu0 0
    %2092 = vmatpush2.bf16.msra.mxu0 0
    %2093 = vmatprep.mubr.bf16.mxu0 0
    %2094 = vmatmul.mubr.bf16.gmra.mxu0 %v474
    %v2095 = vpop.f32.mrf.mxu0
    %v2096 = vadd.f32 %v2055, %v2095
    %v2097 = vpop.f32.mrf.mxu0
    %v2098 = vadd.f32 %v2057, %v2097
    %v2099 = vpop.f32.mrf.mxu0
    %v2100 = vpop.f32.mrf.mxu0
    %2101 = vdwg.mxu0
    %2102 = vmatprep.subr.bf16.mxu0 %v1416
    %2103 = vmatpush1.bf16.msra.mxu0 %v1415
    %2104 = vmatprep.subr.bf16.mxu0 %v1411
    %2105 = vmatpush1.bf16.msra.mxu0 %v1410
    %2106 = vmatprep.subr.bf16.mxu0 %v1406
    %2107 = vmatpush1.bf16.msra.mxu0 %v1405
    %2108 = vmatprep.subr.bf16.mxu0 %v1401
    %2109 = vmatpush1.bf16.msra.mxu0 %v1400
    %2110 = vmatprep.subr.bf16.mxu0 %v1396
    %2111 = vmatpush1.bf16.msra.mxu0 %v1395
    %2112 = vmatprep.subr.bf16.mxu0 %v1391
    %2113 = vmatpush1.bf16.msra.mxu0 %v1390
    %2114 = vmatprep.subr.bf16.mxu0 %v1386
    %2115 = vmatpush1.bf16.msra.mxu0 %v1385
    %2116 = vmatprep.subr.bf16.mxu0 %v1381
    %2117 = vmatpush1.bf16.msra.mxu0 %v1380
    %2118 = vmatprep.subr.bf16.mxu0 %v1456
    %2119 = vmatpush2.bf16.msra.mxu0 %v1455
    %2120 = vmatprep.subr.bf16.mxu0 %v1451
    %2121 = vmatpush2.bf16.msra.mxu0 %v1450
    %2122 = vmatprep.subr.bf16.mxu0 %v1446
    %2123 = vmatpush2.bf16.msra.mxu0 %v1445
    %2124 = vmatprep.subr.bf16.mxu0 %v1441
    %2125 = vmatpush2.bf16.msra.mxu0 %v1440
    %2126 = vmatprep.subr.bf16.mxu0 %v1436
    %2127 = vmatpush2.bf16.msra.mxu0 %v1435
    %2128 = vmatprep.subr.bf16.mxu0 %v1431
    %2129 = vmatpush2.bf16.msra.mxu0 %v1430
    %2130 = vmatprep.subr.bf16.mxu0 %v1426
    %2131 = vmatpush2.bf16.msra.mxu0 %v1425
    %2132 = vmatprep.subr.bf16.mxu0 %v1421
    %2133 = vmatpush2.bf16.msra.mxu0 %v1420
    %2134 = vmatprep.mubr.bf16.mxu0 %v469
    %2135 = vmatmul.mubr.bf16.gmra.mxu0 %v468
    %v2136 = vpop.f32.mrf.mxu0
    %v2137 = vadd.f32 %v443, %v2136
    %v2138 = vpop.f32.mrf.mxu0
    %v2139 = vadd.f32 %v447, %v2138
    %v2140 = vpop.f32.mrf.mxu0
    %v2141 = vpop.f32.mrf.mxu0
    %2142 = vdwg.mxu0
    %2143 = vmatprep.subr.bf16.mxu0 %v1496
    %2144 = vmatpush1.bf16.msra.mxu0 %v1495
    %2145 = vmatprep.subr.bf16.mxu0 %v1491
    %2146 = vmatpush1.bf16.msra.mxu0 %v1490
    %2147 = vmatprep.subr.bf16.mxu0 %v1486
    %2148 = vmatpush1.bf16.msra.mxu0 %v1485
    %2149 = vmatprep.subr.bf16.mxu0 %v1481
    %2150 = vmatpush1.bf16.msra.mxu0 %v1480
    %2151 = vmatprep.subr.bf16.mxu0 %v1476
    %2152 = vmatpush1.bf16.msra.mxu0 %v1475
    %2153 = vmatprep.subr.bf16.mxu0 %v1471
    %2154 = vmatpush1.bf16.msra.mxu0 %v1470
    %2155 = vmatprep.subr.bf16.mxu0 %v1466
    %2156 = vmatpush1.bf16.msra.mxu0 %v1465
    %2157 = vmatprep.subr.bf16.mxu0 %v1461
    %2158 = vmatpush1.bf16.msra.mxu0 %v1460
    %2159 = vmatprep.subr.bf16.mxu0 %v1536
    %2160 = vmatpush2.bf16.msra.mxu0 %v1535
    %2161 = vmatprep.subr.bf16.mxu0 %v1531
    %2162 = vmatpush2.bf16.msra.mxu0 %v1530
    %2163 = vmatprep.subr.bf16.mxu0 %v1526
    %2164 = vmatpush2.bf16.msra.mxu0 %v1525
    %2165 = vmatprep.subr.bf16.mxu0 %v1521
    %2166 = vmatpush2.bf16.msra.mxu0 %v1520
    %2167 = vmatprep.subr.bf16.mxu0 %v1516
    %2168 = vmatpush2.bf16.msra.mxu0 %v1515
    %2169 = vmatprep.subr.bf16.mxu0 %v1511
    %2170 = vmatpush2.bf16.msra.mxu0 %v1510
    %2171 = vmatprep.subr.bf16.mxu0 %v1506
    %2172 = vmatpush2.bf16.msra.mxu0 %v1505
    %2173 = vmatprep.subr.bf16.mxu0 %v1501
    %2174 = vmatpush2.bf16.msra.mxu0 %v1500
    %2175 = vmatprep.mubr.bf16.mxu0 %v471
    %2176 = vmatmul.mubr.bf16.gmra.mxu0 %v470
    %v2177 = vpop.f32.mrf.mxu0
    %v2178 = vadd.f32 %v2137, %v2177
    %v2179 = vpop.f32.mrf.mxu0
    %v2180 = vadd.f32 %v2139, %v2179
    %v2181 = vpop.f32.mrf.mxu0
    %v2182 = vpop.f32.mrf.mxu0
    %2183 = vdwg.mxu0
    %2184 = vmatprep.subr.bf16.mxu0 %v1576
    %2185 = vmatpush1.bf16.msra.mxu0 %v1575
    %2186 = vmatprep.subr.bf16.mxu0 %v1571
    %2187 = vmatpush1.bf16.msra.mxu0 %v1570
    %2188 = vmatprep.subr.bf16.mxu0 %v1566
    %2189 = vmatpush1.bf16.msra.mxu0 %v1565
    %2190 = vmatprep.subr.bf16.mxu0 %v1561
    %2191 = vmatpush1.bf16.msra.mxu0 %v1560
    %2192 = vmatprep.subr.bf16.mxu0 %v1556
    %2193 = vmatpush1.bf16.msra.mxu0 %v1555
    %2194 = vmatprep.subr.bf16.mxu0 %v1551
    %2195 = vmatpush1.bf16.msra.mxu0 %v1550
    %2196 = vmatprep.subr.bf16.mxu0 %v1546
    %2197 = vmatpush1.bf16.msra.mxu0 %v1545
    %2198 = vmatprep.subr.bf16.mxu0 %v1541
    %2199 = vmatpush1.bf16.msra.mxu0 %v1540
    %2200 = vmatprep.subr.bf16.mxu0 %v1616
    %2201 = vmatpush2.bf16.msra.mxu0 %v1615
    %2202 = vmatprep.subr.bf16.mxu0 %v1611
    %2203 = vmatpush2.bf16.msra.mxu0 %v1610
    %2204 = vmatprep.subr.bf16.mxu0 %v1606
    %2205 = vmatpush2.bf16.msra.mxu0 %v1605
    %2206 = vmatprep.subr.bf16.mxu0 %v1601
    %2207 = vmatpush2.bf16.msra.mxu0 %v1600
    %2208 = vmatprep.subr.bf16.mxu0 %v1596
    %2209 = vmatpush2.bf16.msra.mxu0 %v1595
    %2210 = vmatprep.subr.bf16.mxu0 %v1591
    %2211 = vmatpush2.bf16.msra.mxu0 %v1590
    %2212 = vmatprep.subr.bf16.mxu0 %v1586
    %2213 = vmatpush2.bf16.msra.mxu0 %v1585
    %2214 = vmatprep.subr.bf16.mxu0 %v1581
    %2215 = vmatpush2.bf16.msra.mxu0 %v1580
    %2216 = vmatprep.mubr.bf16.mxu0 %v473
    %2217 = vmatmul.mubr.bf16.gmra.mxu0 %v472
    %v2218 = vpop.f32.mrf.mxu0
    %v2219 = vadd.f32 %v2178, %v2218
    %v2220 = vpop.f32.mrf.mxu0
    %v2221 = vadd.f32 %v2180, %v2220
    %v2222 = vpop.f32.mrf.mxu0
    %v2223 = vpop.f32.mrf.mxu0
    %2224 = vdwg.mxu0
    %2225 = vmatprep.subr.bf16.mxu0 %v1656
    %2226 = vmatpush1.bf16.msra.mxu0 %v1655
    %2227 = vmatprep.subr.bf16.mxu0 %v1651
    %2228 = vmatpush1.bf16.msra.mxu0 %v1650
    %2229 = vmatprep.subr.bf16.mxu0 %v1646
    %2230 = vmatpush1.bf16.msra.mxu0 %v1645
    %2231 = vmatprep.subr.bf16.mxu0 %v1641
    %2232 = vmatpush1.bf16.msra.mxu0 %v1640
    %2233 = vmatprep.subr.bf16.mxu0 %v1636
    %2234 = vmatpush1.bf16.msra.mxu0 %v1635
    %2235 = vmatprep.subr.bf16.mxu0 %v1631
    %2236 = vmatpush1.bf16.msra.mxu0 %v1630
    %2237 = vmatprep.subr.bf16.mxu0 %v1626
    %2238 = vmatpush1.bf16.msra.mxu0 %v1625
    %2239 = vmatprep.subr.bf16.mxu0 %v1621
    %2240 = vmatpush1.bf16.msra.mxu0 %v1620
    %2241 = vmatprep.subr.bf16.mxu0 0
    %2242 = vmatpush2.bf16.msra.mxu0 0
    %2243 = vmatprep.subr.bf16.mxu0 0
    %2244 = vmatpush2.bf16.msra.mxu0 0
    %2245 = vmatprep.subr.bf16.mxu0 0
    %2246 = vmatpush2.bf16.msra.mxu0 0
    %2247 = vmatprep.subr.bf16.mxu0 0
    %2248 = vmatpush2.bf16.msra.mxu0 0
    %2249 = vmatprep.subr.bf16.mxu0 0
    %2250 = vmatpush2.bf16.msra.mxu0 0
    %2251 = vmatprep.subr.bf16.mxu0 0
    %2252 = vmatpush2.bf16.msra.mxu0 0
    %2253 = vmatprep.subr.bf16.mxu0 0
    %2254 = vmatpush2.bf16.msra.mxu0 0
    %2255 = vmatprep.subr.bf16.mxu0 0
    %2256 = vmatpush2.bf16.msra.mxu0 0
    %2257 = vmatprep.mubr.bf16.mxu0 0
    %2258 = vmatmul.mubr.bf16.gmra.mxu0 %v474
    %v2259 = vpop.f32.mrf.mxu0
    %v2260 = vadd.f32 %v2219, %v2259
    %v2261 = vpop.f32.mrf.mxu0
    %v2262 = vadd.f32 %v2221, %v2261
    %v2263 = vpop.f32.mrf.mxu0
    %v2264 = vpop.f32.mrf.mxu0
    %2265 = vdwg.mxu0
    %2266 = vmatprep.subr.bf16.mxu0 0
    %2267 = vmatpush1.bf16.msra.mxu0 %v1417
    %2268 = vmatprep.subr.bf16.mxu0 0
    %2269 = vmatpush1.bf16.msra.mxu0 %v1412
    %2270 = vmatprep.subr.bf16.mxu0 0
    %2271 = vmatpush1.bf16.msra.mxu0 %v1407
    %2272 = vmatprep.subr.bf16.mxu0 0
    %2273 = vmatpush1.bf16.msra.mxu0 %v1402
    %2274 = vmatprep.subr.bf16.mxu0 0
    %2275 = vmatpush1.bf16.msra.mxu0 %v1397
    %2276 = vmatprep.subr.bf16.mxu0 0
    %2277 = vmatpush1.bf16.msra.mxu0 %v1392
    %2278 = vmatprep.subr.bf16.mxu0 0
    %2279 = vmatpush1.bf16.msra.mxu0 %v1387
    %2280 = vmatprep.subr.bf16.mxu0 0
    %2281 = vmatpush1.bf16.msra.mxu0 %v1382
    %2282 = vmatprep.subr.bf16.mxu0 0
    %2283 = vmatpush2.bf16.msra.mxu0 %v1457
    %2284 = vmatprep.subr.bf16.mxu0 0
    %2285 = vmatpush2.bf16.msra.mxu0 %v1452
    %2286 = vmatprep.subr.bf16.mxu0 0
    %2287 = vmatpush2.bf16.msra.mxu0 %v1447
    %2288 = vmatprep.subr.bf16.mxu0 0
    %2289 = vmatpush2.bf16.msra.mxu0 %v1442
    %2290 = vmatprep.subr.bf16.mxu0 0
    %2291 = vmatpush2.bf16.msra.mxu0 %v1437
    %2292 = vmatprep.subr.bf16.mxu0 0
    %2293 = vmatpush2.bf16.msra.mxu0 %v1432
    %2294 = vmatprep.subr.bf16.mxu0 0
    %2295 = vmatpush2.bf16.msra.mxu0 %v1427
    %2296 = vmatprep.subr.bf16.mxu0 0
    %2297 = vmatpush2.bf16.msra.mxu0 %v1422
    %2298 = vmatprep.mubr.bf16.mxu0 %v469
    %2299 = vmatmul.mubr.bf16.gmra.mxu0 %v468
    %v2300 = vpop.f32.mrf.mxu0
    %v2301 = vadd.f32 %v451, %v2300
    %v2302 = vpop.f32.mrf.mxu0
    %v2303 = vpop.f32.mrf.mxu0
    %v2304 = vpop.f32.mrf.mxu0
    %2305 = vdwg.mxu0
    %2306 = vmatprep.subr.bf16.mxu0 0
    %2307 = vmatpush1.bf16.msra.mxu0 %v1497
    %2308 = vmatprep.subr.bf16.mxu0 0
    %2309 = vmatpush1.bf16.msra.mxu0 %v1492
    %2310 = vmatprep.subr.bf16.mxu0 0
    %2311 = vmatpush1.bf16.msra.mxu0 %v1487
    %2312 = vmatprep.subr.bf16.mxu0 0
    %2313 = vmatpush1.bf16.msra.mxu0 %v1482
    %2314 = vmatprep.subr.bf16.mxu0 0
    %2315 = vmatpush1.bf16.msra.mxu0 %v1477
    %2316 = vmatprep.subr.bf16.mxu0 0
    %2317 = vmatpush1.bf16.msra.mxu0 %v1472
    %2318 = vmatprep.subr.bf16.mxu0 0
    %2319 = vmatpush1.bf16.msra.mxu0 %v1467
    %2320 = vmatprep.subr.bf16.mxu0 0
    %2321 = vmatpush1.bf16.msra.mxu0 %v1462
    %2322 = vmatprep.subr.bf16.mxu0 0
    %2323 = vmatpush2.bf16.msra.mxu0 %v1537
    %2324 = vmatprep.subr.bf16.mxu0 0
    %2325 = vmatpush2.bf16.msra.mxu0 %v1532
    %2326 = vmatprep.subr.bf16.mxu0 0
    %2327 = vmatpush2.bf16.msra.mxu0 %v1527
    %2328 = vmatprep.subr.bf16.mxu0 0
    %2329 = vmatpush2.bf16.msra.mxu0 %v1522
    %2330 = vmatprep.subr.bf16.mxu0 0
    %2331 = vmatpush2.bf16.msra.mxu0 %v1517
    %2332 = vmatprep.subr.bf16.mxu0 0
    %2333 = vmatpush2.bf16.msra.mxu0 %v1512
    %2334 = vmatprep.subr.bf16.mxu0 0
    %2335 = vmatpush2.bf16.msra.mxu0 %v1507
    %2336 = vmatprep.subr.bf16.mxu0 0
    %2337 = vmatpush2.bf16.msra.mxu0 %v1502
    %2338 = vmatprep.mubr.bf16.mxu0 %v471
    %2339 = vmatmul.mubr.bf16.gmra.mxu0 %v470
    %v2340 = vpop.f32.mrf.mxu0
    %v2341 = vadd.f32 %v2301, %v2340
    %v2342 = vpop.f32.mrf.mxu0
    %v2343 = vpop.f32.mrf.mxu0
    %v2344 = vpop.f32.mrf.mxu0
    %2345 = vdwg.mxu0
    %2346 = vmatprep.subr.bf16.mxu0 0
    %2347 = vmatpush1.bf16.msra.mxu0 %v1577
    %2348 = vmatprep.subr.bf16.mxu0 0
    %2349 = vmatpush1.bf16.msra.mxu0 %v1572
    %2350 = vmatprep.subr.bf16.mxu0 0
    %2351 = vmatpush1.bf16.msra.mxu0 %v1567
    %2352 = vmatprep.subr.bf16.mxu0 0
    %2353 = vmatpush1.bf16.msra.mxu0 %v1562
    %2354 = vmatprep.subr.bf16.mxu0 0
    %2355 = vmatpush1.bf16.msra.mxu0 %v1557
    %2356 = vmatprep.subr.bf16.mxu0 0
    %2357 = vmatpush1.bf16.msra.mxu0 %v1552
    %2358 = vmatprep.subr.bf16.mxu0 0
    %2359 = vmatpush1.bf16.msra.mxu0 %v1547
    %2360 = vmatprep.subr.bf16.mxu0 0
    %2361 = vmatpush1.bf16.msra.mxu0 %v1542
    %2362 = vmatprep.subr.bf16.mxu0 0
    %2363 = vmatpush2.bf16.msra.mxu0 %v1617
    %2364 = vmatprep.subr.bf16.mxu0 0
    %2365 = vmatpush2.bf16.msra.mxu0 %v1612
    %2366 = vmatprep.subr.bf16.mxu0 0
    %2367 = vmatpush2.bf16.msra.mxu0 %v1607
    %2368 = vmatprep.subr.bf16.mxu0 0
    %2369 = vmatpush2.bf16.msra.mxu0 %v1602
    %2370 = vmatprep.subr.bf16.mxu0 0
    %2371 = vmatpush2.bf16.msra.mxu0 %v1597
    %2372 = vmatprep.subr.bf16.mxu0 0
    %2373 = vmatpush2.bf16.msra.mxu0 %v1592
    %2374 = vmatprep.subr.bf16.mxu0 0
    %2375 = vmatpush2.bf16.msra.mxu0 %v1587
    %2376 = vmatprep.subr.bf16.mxu0 0
    %2377 = vmatpush2.bf16.msra.mxu0 %v1582
    %2378 = vmatprep.mubr.bf16.mxu0 %v473
    %2379 = vmatmul.mubr.bf16.gmra.mxu0 %v472
    %v2380 = vpop.f32.mrf.mxu0
    %v2381 = vadd.f32 %v2341, %v2380
    %v2382 = vpop.f32.mrf.mxu0
    %v2383 = vpop.f32.mrf.mxu0
    %v2384 = vpop.f32.mrf.mxu0
    %2385 = vdwg.mxu0
    %2386 = vmatprep.subr.bf16.mxu0 0
    %2387 = vmatpush1.bf16.msra.mxu0 %v1657
    %2388 = vmatprep.subr.bf16.mxu0 0
    %2389 = vmatpush1.bf16.msra.mxu0 %v1652
    %2390 = vmatprep.subr.bf16.mxu0 0
    %2391 = vmatpush1.bf16.msra.mxu0 %v1647
    %2392 = vmatprep.subr.bf16.mxu0 0
    %2393 = vmatpush1.bf16.msra.mxu0 %v1642
    %2394 = vmatprep.subr.bf16.mxu0 0
    %2395 = vmatpush1.bf16.msra.mxu0 %v1637
    %2396 = vmatprep.subr.bf16.mxu0 0
    %2397 = vmatpush1.bf16.msra.mxu0 %v1632
    %2398 = vmatprep.subr.bf16.mxu0 0
    %2399 = vmatpush1.bf16.msra.mxu0 %v1627
    %2400 = vmatprep.subr.bf16.mxu0 0
    %2401 = vmatpush1.bf16.msra.mxu0 %v1622
    %2402 = vmatprep.subr.bf16.mxu0 0
    %2403 = vmatpush2.bf16.msra.mxu0 0
    %2404 = vmatprep.subr.bf16.mxu0 0
    %2405 = vmatpush2.bf16.msra.mxu0 0
    %2406 = vmatprep.subr.bf16.mxu0 0
    %2407 = vmatpush2.bf16.msra.mxu0 0
    %2408 = vmatprep.subr.bf16.mxu0 0
    %2409 = vmatpush2.bf16.msra.mxu0 0
    %2410 = vmatprep.subr.bf16.mxu0 0
    %2411 = vmatpush2.bf16.msra.mxu0 0
    %2412 = vmatprep.subr.bf16.mxu0 0
    %2413 = vmatpush2.bf16.msra.mxu0 0
    %2414 = vmatprep.subr.bf16.mxu0 0
    %2415 = vmatpush2.bf16.msra.mxu0 0
    %2416 = vmatprep.subr.bf16.mxu0 0
    %2417 = vmatpush2.bf16.msra.mxu0 0
    %2418 = vmatprep.mubr.bf16.mxu0 0
    %2419 = vmatmul.mubr.bf16.gmra.mxu0 %v474
    %v2420 = vpop.f32.mrf.mxu0
    %v2421 = vadd.f32 %v2381, %v2420
    %v2422 = vpop.f32.mrf.mxu0
    %v2423 = vpop.f32.mrf.mxu0
    %v2424 = vpop.f32.mrf.mxu0
    %2425 = vdwg.mxu0
    %v2426 = vmax.f32 %v2096, 0.0
    %v2427 = vmax.f32 %v2098, 0.0
    %v2428 = vmax.f32 %v2260, 0.0
    %v2429 = vmax.f32 %v2262, 0.0
    %v2430 = vmax.f32 %v2421, 0.0
    %v2431 = vpack.c.bf16 %v2426, %v2426
    %v2432 = vpack.c.bf16 %v2427, %v2427
    %v2433 = vpack.c.bf16 %v2428, %v2428
    %v2434 = vpack.c.bf16 %v2429, %v2429
    %v2435 = vpack.c.bf16 %v2430, %v2430
    %v2436 = vld [vmem:[#allocation7] sm:$0xf]
    %v2437 = vld [vmem:[#allocation7 + $0x4] sm:$0xf]
    %v2438 = vld [vmem:[#allocation7 + $0x8] sm:$0xf]
    %v2439 = vld [vmem:[#allocation7 + $0xc] sm:$0xf]
    %v2440 = vld [vmem:[#allocation7 + $0x10] sm:$0xf]
    %v2441 = vld [vmem:[#allocation7 + $0x14] sm:$0xf]
    %v2442 = vld [vmem:[#allocation7 + $0x18] sm:$0xf]
    %v2443 = vld [vmem:[#allocation7 + $0x1c] sm:$0xf]
    %v2444 = vld [vmem:[#allocation7 + $0x20] sm:$0xf]
    %v2445 = vld [vmem:[#allocation7 + $0x24] sm:$0xf]
    %v2446 = vld [vmem:[#allocation7 + $0x28] sm:$0xf]
    %v2447 = vld [vmem:[#allocation7 + $0x2c] sm:$0xf]
    %v2448 = vld [vmem:[#allocation7 + $0x30] sm:$0xf]
    %v2449 = vld [vmem:[#allocation7 + $0x34] sm:$0xf]
    %v2450 = vld [vmem:[#allocation7 + $0x38] sm:$0xf]
    %v2451 = vld [vmem:[#allocation7 + $0x3c] sm:$0xf]
    %v2452 = vld [vmem:[#allocation7 + $0x40] sm:$0xf]
    %v2453 = vld [vmem:[#allocation7 + $0x44] sm:$0xf]
    %v2454 = vld [vmem:[#allocation7 + $0x48] sm:$0xf]
    %v2455 = vld [vmem:[#allocation7 + $0x4c] sm:$0xf]
    %v2456 = vld [vmem:[#allocation7 + $0x50] sm:$0xf]
    %v2457 = vld [vmem:[#allocation7 + $0x54] sm:$0xf]
    %v2458 = vld [vmem:[#allocation7 + $0x58] sm:$0xf]
    %v2459 = vld [vmem:[#allocation7 + $0x5c] sm:$0xf]
    %v2460 = vld [vmem:[#allocation7 + $0x60] sm:$0xf]
    %v2461 = vld [vmem:[#allocation7 + $0x64] sm:$0xf]
    %v2462 = vld [vmem:[#allocation7 + $0x68] sm:$0xf]
    %v2463 = vld [vmem:[#allocation7 + $0x6c] sm:$0xf]
    %v2464 = vld [vmem:[#allocation7 + $0x70] sm:$0xf]
    %v2465 = vld [vmem:[#allocation7 + $0x74] sm:$0xf]
    %v2466 = vld [vmem:[#allocation7 + $0x78] sm:$0xf]
    %v2467 = vld [vmem:[#allocation7 + $0x7c] sm:$0xf]
    %v2468 = vld [vmem:[#allocation7 + $0x80] sm:$0xf]
    %v2469 = vld [vmem:[#allocation7 + $0x84] sm:$0xf]
    %v2470 = vld [vmem:[#allocation7 + $0x88] sm:$0xf]
    %v2471 = vld [vmem:[#allocation7 + $0x8c] sm:$0xf]
    %v2472 = vld [vmem:[#allocation7 + $0x90] sm:$0xf]
    %v2473 = vld [vmem:[#allocation7 + $0x94] sm:$0xf]
    %v2474 = vld [vmem:[#allocation7 + $0x98] sm:$0xf]
    %v2475 = vld [vmem:[#allocation7 + $0x9c] sm:$0xf]
    %v2476 = vld [vmem:[#allocation7 + $0xa0] sm:$0xf]
    %v2477 = vld [vmem:[#allocation7 + $0xa4] sm:$0xf]
    %v2478 = vld [vmem:[#allocation7 + $0xa8] sm:$0xf]
    %v2479 = vld [vmem:[#allocation7 + $0xac] sm:$0xf]
    %v2480 = vld [vmem:[#allocation7 + $0xb0] sm:$0xf]
    %v2481 = vld [vmem:[#allocation7 + $0xb4] sm:$0xf]
    %v2482 = vld [vmem:[#allocation7 + $0xb8] sm:$0xf]
    %v2483 = vld [vmem:[#allocation7 + $0xbc] sm:$0xf]
    %v2484 = vld [vmem:[#allocation7 + $0xc0] sm:$0xf]
    %v2485 = vld [vmem:[#allocation7 + $0xc4] sm:$0xf]
    %v2486 = vld [vmem:[#allocation7 + $0xc8] sm:$0xf]
    %v2487 = vld [vmem:[#allocation7 + $0xcc] sm:$0xf]
    %v2488 = vld [vmem:[#allocation7 + $0xd0] sm:$0xf]
    %v2489 = vld [vmem:[#allocation7 + $0xd4] sm:$0xf]
    %v2490 = vld [vmem:[#allocation7 + $0xd8] sm:$0xf]
    %v2491 = vld [vmem:[#allocation7 + $0xdc] sm:$0xf]
    %v2492 = vld [vmem:[#allocation7 + $0xe0] sm:$0xf]
    %v2493 = vld [vmem:[#allocation7 + $0xe4] sm:$0xf]
    %v2494 = vld [vmem:[#allocation7 + $0xe8] sm:$0xf]
    %v2495 = vld [vmem:[#allocation7 + $0xec] sm:$0xf]
    %v2496 = vld [vmem:[#allocation7 + $0xf0] sm:$0xf]
    %v2497 = vld [vmem:[#allocation7 + $0xf4] sm:$0xf]
    %v2498 = vld [vmem:[#allocation7 + $0xf8] sm:$0xf]
    %v2499 = vld [vmem:[#allocation7 + $0xfc] sm:$0xf]
    %v2500 = vld [vmem:[#allocation7 + $0x100] sm:$0xf]
    %v2501 = vld [vmem:[#allocation7 + $0x104] sm:$0xf]
    %v2502 = vld [vmem:[#allocation7 + $0x108] sm:$0xf]
    %v2503 = vld [vmem:[#allocation7 + $0x10c] sm:$0xf]
    %v2504 = vld [vmem:[#allocation7 + $0x110] sm:$0xf]
    %v2505 = vld [vmem:[#allocation7 + $0x114] sm:$0xf]
    %v2506 = vld [vmem:[#allocation7 + $0x118] sm:$0xf]
    %v2507 = vld [vmem:[#allocation7 + $0x11c] sm:$0xf]
    %v2508 = vld [vmem:[#allocation7 + $0x120] sm:$0xf]
    %v2509 = vld [vmem:[#allocation7 + $0x124] sm:$0xf]
    %v2510 = vld [vmem:[#allocation7 + $0x128] sm:$0xf]
    %v2511 = vld [vmem:[#allocation7 + $0x12c] sm:$0xf]
    %v2512 = vld [vmem:[#allocation7 + $0x130] sm:$0xf]
    %v2513 = vld [vmem:[#allocation7 + $0x134] sm:$0xf]
    %v2514 = vld [vmem:[#allocation7 + $0x138] sm:$0xf]
    %v2515 = vld [vmem:[#allocation7 + $0x13c] sm:$0xf]
    %v2596 = vunpack.c.l.b16 %v2436
    %v2597 = vunpack.c.l.b16 %v2437
    %v2598 = vunpack.c.l.b16 %v2438
    %v2599 = vunpack.c.l.b16 %v2439
    %v2600 = vunpack.c.l.b16 %v2440
    %v2601 = vunpack.c.l.b16 %v2441
    %v2602 = vunpack.c.l.b16 %v2442
    %v2603 = vunpack.c.l.b16 %v2443
    %v2604 = vunpack.c.l.b16 %v2444
    %v2605 = vunpack.c.l.b16 %v2445
    %v2606 = vunpack.c.l.b16 %v2446
    %v2607 = vunpack.c.l.b16 %v2447
    %v2608 = vunpack.c.l.b16 %v2448
    %v2609 = vunpack.c.l.b16 %v2449
    %v2610 = vunpack.c.l.b16 %v2450
    %v2611 = vunpack.c.l.b16 %v2451
    %v2612 = vunpack.c.l.b16 %v2452
    %v2613 = vunpack.c.l.b16 %v2453
    %v2614 = vunpack.c.l.b16 %v2454
    %v2615 = vunpack.c.l.b16 %v2455
    %v2616 = vunpack.c.l.b16 %v2456
    %v2617 = vunpack.c.l.b16 %v2457
    %v2618 = vunpack.c.l.b16 %v2458
    %v2619 = vunpack.c.l.b16 %v2459
    %v2620 = vunpack.c.l.b16 %v2460
    %v2621 = vunpack.c.l.b16 %v2461
    %v2622 = vunpack.c.l.b16 %v2462
    %v2623 = vunpack.c.l.b16 %v2463
    %v2624 = vunpack.c.l.b16 %v2464
    %v2625 = vunpack.c.l.b16 %v2465
    %v2626 = vunpack.c.l.b16 %v2466
    %v2627 = vunpack.c.l.b16 %v2467
    %v2628 = vunpack.c.l.b16 %v2468
    %v2629 = vunpack.c.l.b16 %v2469
    %v2630 = vunpack.c.l.b16 %v2470
    %v2631 = vunpack.c.l.b16 %v2471
    %v2632 = vunpack.c.l.b16 %v2472
    %v2633 = vunpack.c.l.b16 %v2473
    %v2634 = vunpack.c.l.b16 %v2474
    %v2635 = vunpack.c.l.b16 %v2475
    %v2636 = vunpack.c.l.b16 %v2476
    %v2637 = vunpack.c.l.b16 %v2477
    %v2638 = vunpack.c.l.b16 %v2478
    %v2639 = vunpack.c.l.b16 %v2479
    %v2640 = vunpack.c.l.b16 %v2480
    %v2641 = vunpack.c.l.b16 %v2481
    %v2642 = vunpack.c.l.b16 %v2482
    %v2643 = vunpack.c.l.b16 %v2483
    %v2644 = vunpack.c.l.b16 %v2484
    %v2645 = vunpack.c.l.b16 %v2485
    %v2646 = vunpack.c.l.b16 %v2486
    %v2647 = vunpack.c.l.b16 %v2487
    %v2648 = vunpack.c.l.b16 %v2488
    %v2649 = vunpack.c.l.b16 %v2489
    %v2650 = vunpack.c.l.b16 %v2490
    %v2651 = vunpack.c.l.b16 %v2491
    %v2652 = vunpack.c.l.b16 %v2492
    %v2653 = vunpack.c.l.b16 %v2493
    %v2654 = vunpack.c.l.b16 %v2494
    %v2655 = vunpack.c.l.b16 %v2495
    %v2656 = vunpack.c.l.b16 %v2496
    %v2657 = vunpack.c.l.b16 %v2497
    %v2658 = vunpack.c.l.b16 %v2498
    %v2659 = vunpack.c.l.b16 %v2499
    %v2660 = vunpack.c.l.b16 %v2500
    %v2661 = vunpack.c.l.b16 %v2501
    %v2662 = vunpack.c.l.b16 %v2502
    %v2663 = vunpack.c.l.b16 %v2503
    %v2664 = vunpack.c.l.b16 %v2504
    %v2665 = vunpack.c.l.b16 %v2505
    %v2666 = vunpack.c.l.b16 %v2506
    %v2667 = vunpack.c.l.b16 %v2507
    %v2668 = vunpack.c.l.b16 %v2508
    %v2669 = vunpack.c.l.b16 %v2509
    %v2670 = vunpack.c.l.b16 %v2510
    %v2671 = vunpack.c.l.b16 %v2511
    %v2672 = vunpack.c.l.b16 %v2512
    %v2673 = vunpack.c.l.b16 %v2513
    %v2674 = vunpack.c.l.b16 %v2514
    %v2675 = vunpack.c.l.b16 %v2515
    %v2676 = vpack.c.b16 %v2597, %v2596
    %v2677 = vpack.c.b16 %v2599, %v2598
    %v2678 = vpack.c.b16 %v2601, %v2600
    %v2679 = vpack.c.b16 %v2603, %v2602
    %v2680 = vpack.c.b16 %v2605, %v2604
    %v2681 = vpack.c.b16 %v2607, %v2606
    %v2682 = vpack.c.b16 %v2609, %v2608
    %v2683 = vpack.c.b16 %v2611, %v2610
    %v2684 = vpack.c.b16 %v2613, %v2612
    %v2685 = vpack.c.b16 %v2615, %v2614
    %v2686 = vpack.c.b16 %v2617, %v2616
    %v2687 = vpack.c.b16 %v2619, %v2618
    %v2688 = vpack.c.b16 %v2621, %v2620
    %v2689 = vpack.c.b16 %v2623, %v2622
    %v2690 = vpack.c.b16 %v2625, %v2624
    %v2691 = vpack.c.b16 %v2627, %v2626
    %v2692 = vpack.c.b16 %v2629, %v2628
    %v2693 = vpack.c.b16 %v2631, %v2630
    %v2694 = vpack.c.b16 %v2633, %v2632
    %v2695 = vpack.c.b16 %v2635, %v2634
    %v2696 = vpack.c.b16 %v2637, %v2636
    %v2697 = vpack.c.b16 %v2639, %v2638
    %v2698 = vpack.c.b16 %v2641, %v2640
    %v2699 = vpack.c.b16 %v2643, %v2642
    %v2700 = vpack.c.b16 %v2645, %v2644
    %v2701 = vpack.c.b16 %v2647, %v2646
    %v2702 = vpack.c.b16 %v2649, %v2648
    %v2703 = vpack.c.b16 %v2651, %v2650
    %v2704 = vpack.c.b16 %v2653, %v2652
    %v2705 = vpack.c.b16 %v2655, %v2654
    %v2706 = vpack.c.b16 %v2657, %v2656
    %v2707 = vpack.c.b16 %v2659, %v2658
    %v2708 = vpack.c.b16 %v2661, %v2660
    %v2709 = vpack.c.b16 %v2663, %v2662
    %v2710 = vpack.c.b16 %v2665, %v2664
    %v2711 = vpack.c.b16 %v2667, %v2666
    %v2712 = vpack.c.b16 %v2669, %v2668
    %v2713 = vpack.c.b16 %v2671, %v2670
    %v2714 = vpack.c.b16 %v2673, %v2672
    %v2715 = vpack.c.b16 %v2675, %v2674
    %2756 = vmatprep.subr.bf16.mxu0 0
    %2757 = vmatpush1.bf16.msra.mxu0 %v2683
    %2758 = vmatprep.subr.bf16.mxu0 0
    %2759 = vmatpush1.bf16.msra.mxu0 %v2682
    %2760 = vmatprep.subr.bf16.mxu0 0
    %2761 = vmatpush1.bf16.msra.mxu0 %v2681
    %2762 = vmatprep.subr.bf16.mxu0 0
    %2763 = vmatpush1.bf16.msra.mxu0 %v2680
    %2764 = vmatprep.subr.bf16.mxu0 0
    %2765 = vmatpush1.bf16.msra.mxu0 %v2679
    %2766 = vmatprep.subr.bf16.mxu0 0
    %2767 = vmatpush1.bf16.msra.mxu0 %v2678
    %2768 = vmatprep.subr.bf16.mxu0 0
    %2769 = vmatpush1.bf16.msra.mxu0 %v2677
    %2770 = vmatprep.subr.bf16.mxu0 0
    %2771 = vmatpush1.bf16.msra.mxu0 %v2676
    %2772 = vmatprep.subr.bf16.mxu0 0
    %2773 = vmatpush2.bf16.msra.mxu0 %v2691
    %2774 = vmatprep.subr.bf16.mxu0 0
    %2775 = vmatpush2.bf16.msra.mxu0 %v2690
    %2776 = vmatprep.subr.bf16.mxu0 0
    %2777 = vmatpush2.bf16.msra.mxu0 %v2689
    %2778 = vmatprep.subr.bf16.mxu0 0
    %2779 = vmatpush2.bf16.msra.mxu0 %v2688
    %2780 = vmatprep.subr.bf16.mxu0 0
    %2781 = vmatpush2.bf16.msra.mxu0 %v2687
    %2782 = vmatprep.subr.bf16.mxu0 0
    %2783 = vmatpush2.bf16.msra.mxu0 %v2686
    %2784 = vmatprep.subr.bf16.mxu0 0
    %2785 = vmatpush2.bf16.msra.mxu0 %v2685
    %2786 = vmatprep.subr.bf16.mxu0 0
    %2787 = vmatpush2.bf16.msra.mxu0 %v2684
    %2788 = vmatprep.mubr.bf16.mxu0 %v2432
    %2789 = vmatmul.mubr.bf16.gmra.mxu0 %v2431
    %v2790 = vpop.f32.mrf.mxu0
    %v2791 = vadd.f32 0.0, %v2790
    %v2792 = vpop.f32.mrf.mxu0
    %v2793 = vpop.f32.mrf.mxu0
    %v2794 = vpop.f32.mrf.mxu0
    %2795 = vdwg.mxu0
    %2796 = vmatprep.subr.bf16.mxu0 0
    %2797 = vmatpush1.bf16.msra.mxu0 %v2699
    %2798 = vmatprep.subr.bf16.mxu0 0
    %2799 = vmatpush1.bf16.msra.mxu0 %v2698
    %2800 = vmatprep.subr.bf16.mxu0 0
    %2801 = vmatpush1.bf16.msra.mxu0 %v2697
    %2802 = vmatprep.subr.bf16.mxu0 0
    %2803 = vmatpush1.bf16.msra.mxu0 %v2696
    %2804 = vmatprep.subr.bf16.mxu0 0
    %2805 = vmatpush1.bf16.msra.mxu0 %v2695
    %2806 = vmatprep.subr.bf16.mxu0 0
    %2807 = vmatpush1.bf16.msra.mxu0 %v2694
    %2808 = vmatprep.subr.bf16.mxu0 0
    %2809 = vmatpush1.bf16.msra.mxu0 %v2693
    %2810 = vmatprep.subr.bf16.mxu0 0
    %2811 = vmatpush1.bf16.msra.mxu0 %v2692
    %2812 = vmatprep.subr.bf16.mxu0 0
    %2813 = vmatpush2.bf16.msra.mxu0 %v2707
    %2814 = vmatprep.subr.bf16.mxu0 0
    %2815 = vmatpush2.bf16.msra.mxu0 %v2706
    %2816 = vmatprep.subr.bf16.mxu0 0
    %2817 = vmatpush2.bf16.msra.mxu0 %v2705
    %2818 = vmatprep.subr.bf16.mxu0 0
    %2819 = vmatpush2.bf16.msra.mxu0 %v2704
    %2820 = vmatprep.subr.bf16.mxu0 0
    %2821 = vmatpush2.bf16.msra.mxu0 %v2703
    %2822 = vmatprep.subr.bf16.mxu0 0
    %2823 = vmatpush2.bf16.msra.mxu0 %v2702
    %2824 = vmatprep.subr.bf16.mxu0 0
    %2825 = vmatpush2.bf16.msra.mxu0 %v2701
    %2826 = vmatprep.subr.bf16.mxu0 0
    %2827 = vmatpush2.bf16.msra.mxu0 %v2700
    %2828 = vmatprep.mubr.bf16.mxu0 %v2434
    %2829 = vmatmul.mubr.bf16.gmra.mxu0 %v2433
    %v2830 = vpop.f32.mrf.mxu0
    %v2831 = vadd.f32 %v2791, %v2830
    %v2832 = vpop.f32.mrf.mxu0
    %v2833 = vpop.f32.mrf.mxu0
    %v2834 = vpop.f32.mrf.mxu0
    %2835 = vdwg.mxu0
    %2836 = vmatprep.subr.bf16.mxu0 0
    %2837 = vmatpush1.bf16.msra.mxu0 %v2715
    %2838 = vmatprep.subr.bf16.mxu0 0
    %2839 = vmatpush1.bf16.msra.mxu0 %v2714
    %2840 = vmatprep.subr.bf16.mxu0 0
    %2841 = vmatpush1.bf16.msra.mxu0 %v2713
    %2842 = vmatprep.subr.bf16.mxu0 0
    %2843 = vmatpush1.bf16.msra.mxu0 %v2712
    %2844 = vmatprep.subr.bf16.mxu0 0
    %2845 = vmatpush1.bf16.msra.mxu0 %v2711
    %2846 = vmatprep.subr.bf16.mxu0 0
    %2847 = vmatpush1.bf16.msra.mxu0 %v2710
    %2848 = vmatprep.subr.bf16.mxu0 0
    %2849 = vmatpush1.bf16.msra.mxu0 %v2709
    %2850 = vmatprep.subr.bf16.mxu0 0
    %2851 = vmatpush1.bf16.msra.mxu0 %v2708
    %2852 = vmatprep.subr.bf16.mxu0 0
    %2853 = vmatpush2.bf16.msra.mxu0 0
    %2854 = vmatprep.subr.bf16.mxu0 0
    %2855 = vmatpush2.bf16.msra.mxu0 0
    %2856 = vmatprep.subr.bf16.mxu0 0
    %2857 = vmatpush2.bf16.msra.mxu0 0
    %2858 = vmatprep.subr.bf16.mxu0 0
    %2859 = vmatpush2.bf16.msra.mxu0 0
    %2860 = vmatprep.subr.bf16.mxu0 0
    %2861 = vmatpush2.bf16.msra.mxu0 0
    %2862 = vmatprep.subr.bf16.mxu0 0
    %2863 = vmatpush2.bf16.msra.mxu0 0
    %2864 = vmatprep.subr.bf16.mxu0 0
    %2865 = vmatpush2.bf16.msra.mxu0 0
    %2866 = vmatprep.subr.bf16.mxu0 0
    %2867 = vmatpush2.bf16.msra.mxu0 0
    %2868 = vmatprep.mubr.bf16.mxu0 0
    %2869 = vmatmul.mubr.bf16.gmra.mxu0 %v2435
    %v2870 = vpop.f32.mrf.mxu0
    %v2871 = vadd.f32 %v2831, %v2870
    %v2872 = vpop.f32.mrf.mxu0
    %v2873 = vpop.f32.mrf.mxu0
    %v2874 = vpop.f32.mrf.mxu0
    %2875 = vdwg.mxu0
    %v2876 = vmax.f32 %v2871, 0.0
    %v2877 = vpack.c.bf16 %v2876, %v2876
    %v2878 = vld [vmem:[#allocation9] sm:$0xf]
    %v2879 = vld [vmem:[#allocation9 + $0x4] sm:$0xf]
    %v2880 = vld [vmem:[#allocation9 + $0x8] sm:$0xf]
    %v2881 = vld [vmem:[#allocation9 + $0xc] sm:$0xf]
    %v2882 = vld [vmem:[#allocation9 + $0x10] sm:$0xf]
    %v2883 = vld [vmem:[#allocation9 + $0x14] sm:$0xf]
    %v2884 = vld [vmem:[#allocation9 + $0x18] sm:$0xf]
    %v2885 = vld [vmem:[#allocation9 + $0x1c] sm:$0xf]
    %v2886 = vld [vmem:[#allocation9 + $0x20] sm:$0xf]
    %v2887 = vld [vmem:[#allocation9 + $0x24] sm:$0xf]
    %v2888 = vld [vmem:[#allocation9 + $0x28] sm:$0xf]
    %v2889 = vld [vmem:[#allocation9 + $0x2c] sm:$0xf]
    %v2890 = vld [vmem:[#allocation9 + $0x30] sm:$0xf]
    %v2891 = vld [vmem:[#allocation9 + $0x34] sm:$0xf]
    %v2892 = vld [vmem:[#allocation9 + $0x38] sm:$0xf]
    %v2893 = vld [vmem:[#allocation9 + $0x3c] sm:$0xf]
    %v2910 = vunpack.c.l.b16 %v2878
    %v2911 = vunpack.c.l.b16 %v2879
    %v2912 = vunpack.c.l.b16 %v2880
    %v2913 = vunpack.c.l.b16 %v2881
    %v2914 = vunpack.c.l.b16 %v2882
    %v2915 = vunpack.c.l.b16 %v2883
    %v2916 = vunpack.c.l.b16 %v2884
    %v2917 = vunpack.c.l.b16 %v2885
    %v2918 = vunpack.c.l.b16 %v2886
    %v2919 = vunpack.c.l.b16 %v2887
    %v2920 = vunpack.c.l.b16 %v2888
    %v2921 = vunpack.c.l.b16 %v2889
    %v2922 = vunpack.c.l.b16 %v2890
    %v2923 = vunpack.c.l.b16 %v2891
    %v2924 = vunpack.c.l.b16 %v2892
    %v2925 = vunpack.c.l.b16 %v2893
    %v2926 = vpack.c.b16 %v2911, %v2910
    %v2927 = vpack.c.b16 %v2913, %v2912
    %v2928 = vpack.c.b16 %v2915, %v2914
    %v2929 = vpack.c.b16 %v2917, %v2916
    %v2930 = vpack.c.b16 %v2919, %v2918
    %v2931 = vpack.c.b16 %v2921, %v2920
    %v2932 = vpack.c.b16 %v2923, %v2922
    %v2933 = vpack.c.b16 %v2925, %v2924
    %2942 = vmatprep.subr.bf16.mxu0 0
    %2943 = vmatpush1.bf16.msra.mxu0 %v2933
    %2944 = vmatprep.subr.bf16.mxu0 0
    %2945 = vmatpush1.bf16.msra.mxu0 %v2932
    %2946 = vmatprep.subr.bf16.mxu0 0
    %2947 = vmatpush1.bf16.msra.mxu0 %v2931
    %2948 = vmatprep.subr.bf16.mxu0 0
    %2949 = vmatpush1.bf16.msra.mxu0 %v2930
    %2950 = vmatprep.subr.bf16.mxu0 0
    %2951 = vmatpush1.bf16.msra.mxu0 %v2929
    %2952 = vmatprep.subr.bf16.mxu0 0
    %2953 = vmatpush1.bf16.msra.mxu0 %v2928
    %2954 = vmatprep.subr.bf16.mxu0 0
    %2955 = vmatpush1.bf16.msra.mxu0 %v2927
    %2956 = vmatprep.subr.bf16.mxu0 0
    %2957 = vmatpush1.bf16.msra.mxu0 %v2926
    %2958 = vmatprep.subr.bf16.mxu0 0
    %2959 = vmatpush2.bf16.msra.mxu0 0
    %2960 = vmatprep.subr.bf16.mxu0 0
    %2961 = vmatpush2.bf16.msra.mxu0 0
    %2962 = vmatprep.subr.bf16.mxu0 0
    %2963 = vmatpush2.bf16.msra.mxu0 0
    %2964 = vmatprep.subr.bf16.mxu0 0
    %2965 = vmatpush2.bf16.msra.mxu0 0
    %2966 = vmatprep.subr.bf16.mxu0 0
    %2967 = vmatpush2.bf16.msra.mxu0 0
    %2968 = vmatprep.subr.bf16.mxu0 0
    %2969 = vmatpush2.bf16.msra.mxu0 0
    %2970 = vmatprep.subr.bf16.mxu0 0
    %2971 = vmatpush2.bf16.msra.mxu0 0
    %2972 = vmatprep.subr.bf16.mxu0 0
    %2973 = vmatpush2.bf16.msra.mxu0 0
    %2974 = vmatprep.mubr.bf16.mxu0 0
    %2975 = vmatmul.mubr.bf16.gmra.mxu0 %v2877
    %v2976 = vpop.f32.mrf.mxu0
    %v2977 = vadd.f32 0.0, %v2976
    %v2978 = vpop.f32.mrf.mxu0
    %v2979 = vpop.f32.mrf.mxu0
    %v2980 = vpop.f32.mrf.mxu0
    %2981 = vdwg.mxu0
    %2982 = vst [vmem:[%s6] sm:$0xff] %v2977
    %v2983 = vld [vmem:[#allocation4] sm:$0x1]
    %v2985 = vlaneseq
    %v2986 = vshrl.u32 %v2985, 7
    %v2987 = vsub.s32 0, %v2986
    %v2988 = vrot.slane %v2983, %v2987
    %v2990 = vadd.f32 %v2977, %v2988
    %2991 = vmax.xlane.f32.xlu0 %v2990
    %v2992 = vpop.xlane.xlu0 %2991
    %v2993 = vsub.f32 %v2990, %v2992
    %v2994 = vmul.f32 %v2993, 1.442695
    %v2995 = vpow.pop %v2994
    %2996 = vadd.xlane.f32.xlu0 %v2995
    %v2997 = vpop.xlane.xlu0 %2996
    %v2998 = vrcp.pop %v2997
    %v2999 = vmul.f32 %v2995, %v2998
    %3000 = vst [vmem:[%s7] sm:$0xff] %v2999
    // Predicated region
    $region46: #{forward.1} parent=1 // pred_check
      _
    $region47: #{forward.1} parent=1 // pred_check_branch
      %3002 = sbr.rel (0) target = $region49
    $region48: #{forward.1} parent=1 // pred_region
      _
    $region49: #{forward.1} parent=1 // pred_fallthru
      _
    // Predicated region
    $region50: #{forward.1} parent=1 // pred_check
      _
    $region51: #{forward.1} parent=1 // pred_check_branch
      %3004 = sbr.rel (0) target = $region53
    $region52: #{forward.1} parent=1 // pred_region
      _
    $region53: #{forward.1} parent=1 // pred_fallthru
      _
    // Predicated region
    $region54: #{forward.1} parent=1 // pred_check
      _
    $region55: #{forward.1} parent=1 // pred_check_branch
      %3006 = sbr.rel (0) target = $region57
    $region56: #{forward.1} parent=1 // pred_region
      _
    $region57: #{forward.1} parent=1 // pred_fallthru
      _
    // Predicated region
    $region58: #{forward.1} parent=1 // pred_check
      _
    $region59: #{forward.1} parent=1 // pred_check_branch
      %3008 = sbr.rel (0) target = $region61
    $region60: #{forward.1} parent=1 // pred_region
      _
    $region61: #{forward.1} parent=1 // pred_fallthru
      _
    %3009 = vsyncpa [#allocation3], 1
    %3010 = vsyncpa [#allocation5], 1
    %3011 = vsyncpa [#allocation8], 1

</llo_original>
